<compile_context>
chip_gen: v5e
topology: v5e:2x2
jax: 0.10.0
libtpu: 0.0.40
codegen_flags: <defaults>
</compile_context>

<pallas_src>
import functools
import math

import jax
import jax.numpy as jnp
import numpy as np
from jax import lax
from jax.experimental import pallas as pl
from jax.experimental.pallas import tpu as pltpu


# ----------------------------------------------------------------------------
# Hardware / sizing helpers
# ----------------------------------------------------------------------------
def _vmem_capacity_bytes(default=64 << 20):
    """Generation-aware VMEM capacity (v5e/v6e: 128 MiB, v7x: 64 MiB)."""
    try:
        return int(pltpu.get_tpu_info().vmem_capacity_bytes)
    except Exception:
        return default


def _vmem_limit(cap):
    return max(32 << 20, min(int(0.75 * cap), 96 << 20))


def _divisors(n):
    return [d for d in range(1, n + 1) if n % d == 0]


def _pick_lane_tile(Lfull, K, budget_bytes):
    """Largest output-lane chunk (divisor of W*Cout) whose double-buffered bf16
    band chunk fits the budget. Chunk must be lane-aligned (x128) or full."""
    best = None
    for d in _divisors(Lfull):
        if d != Lfull and d % 128 != 0:
            continue
        if 2 * 3 * K * d * 2 <= budget_bytes:
            best = d
    # TODO(synk): pad Lfull to a multiple of 128 when nothing aligned fits.
    return best if best is not None else Lfull


def _pick_nblk(N, H, K, Lt, budget_bytes):
    """Number of (b,t) slabs per conv grid step: as large as the VMEM budget
    allows (MXU fill), capped so in-kernel temporaries stay bounded."""
    best = 1
    for d in _divisors(N):
        per = d * H * (2 * 4 * K + 2 * 4 * Lt + 3 * 4 * Lt + 2 * K)
        if d * H <= 1024 and per <= budget_bytes:
            best = d
    return best


def _pick_row_block(R, T, L, n_big_inputs, budget_bytes):
    """LIF row block: fits budget, prefers multiples of 8 and >=2 (ideally an
    even number of) equal grid blocks so both v7x TensorCores get work."""
    def fits(d):
        return 2 * (n_big_inputs + 1) * T * d * L * 4 <= budget_bytes

    divs = [d for d in _divisors(R) if fits(d)]
    if not divs:
        return R  # TODO(synk): padded/masked-tail path
    mult8 = [d for d in divs if d % 8 == 0]
    cands = mult8 if mult8 else divs
    for pred in (lambda d: R // d >= 2 and (R // d) % 2 == 0,
                 lambda d: R // d >= 2,
                 lambda d: True):
        sel = [d for d in cands if pred(d)]
        if sel:
            return max(sel)
    return max(cands)


# ----------------------------------------------------------------------------
# Banded (block-Toeplitz) conv weights, W boundary baked in, bf16.
# ----------------------------------------------------------------------------
def band_conv_weights(w_oihw, W, dtype=jnp.bfloat16):
    """Band M of shape (3, W*Cin, W*Cout) for a 3x3/stride1/pad1 conv.

    For dy in {0,1,2}, Y_dy = X_rows @ M[dy] (rows = image rows, lanes = (wc,ci))
    is the dy-contribution; output row h receives Y0[h-1] + Y1[h] + Y2[h+1]
    (the missing rows are the zero H-padding, handled in-kernel). The zero
    W-padding is baked in by dropping out-of-range dx columns.
    """
    w = np.asarray(w_oihw, np.float32)            # (Cout, Cin, 3, 3)
    Cout, Cin, KH, KW = w.shape
    M = np.zeros((KH, W * Cin, W * Cout), np.float32)
    for dy in range(KH):
        for dx in range(KW):
            blk = w[:, :, dy, dx].T               # (Cin, Cout)
            for wc in range(W):
                win = wc + dx - 1                 # input column (pad = 1)
                if 0 <= win < W:
                    M[dy, win * Cin:(win + 1) * Cin,
                      wc * Cout:(wc + 1) * Cout] = blk
    return jnp.asarray(M, dtype)


# ----------------------------------------------------------------------------
# Conv 3x3 (s1, p1) + fused BatchNorm batch statistics.
# Grid = (W-lane chunks, (b,t)-slab blocks); lane chunk is the outer axis so the
# weight chunk is DMA'd once and reused across the inner slab sweep.
# ----------------------------------------------------------------------------
def _conv3x3_bn_kernel(x_ref, w_ref, b_ref, o_ref, sum_ref, sq_ref):
    # x_ref:   (nblk, H, W*Cin)   f32 activation slabs (NO padding)
    # w_ref:   (3, W*Cin, Lt)     bf16 banded weight chunk
    # b_ref:   (1, Lt)            f32 bias chunk (tiled over W)
    # o_ref:   (nblk, H, Lt)      f32 conv output chunk (lane-dense)
    # sum/sq:  (1, Lt)            per-step partial BN statistics (pre-bias)
    nblk, H, K = x_ref.shape
    Lt = o_ref.shape[2]
    R = nblk * H

    xb = x_ref[...].reshape(R, K).astype(jnp.bfloat16)   # bf16 MXU operands
    y0 = jnp.dot(xb, w_ref[0], preferred_element_type=jnp.float32)
    y1 = jnp.dot(xb, w_ref[1], preferred_element_type=jnp.float32)
    y2 = jnp.dot(xb, w_ref[2], preferred_element_type=jnp.float32)

    # In-register zero H-halo: dy=0/2 contributions are full-height matmuls
    # shifted one row down/up; slab-boundary rows (which would otherwise wrap in
    # from the neighbouring (b,t) slab) are masked to zero.
    h_idx = lax.broadcasted_iota(jnp.int32, (nblk, H, Lt), 1).reshape(R, Lt)
    acc = y1
    acc = acc + jnp.where(h_idx == 0, 0.0, pltpu.roll(y0, shift=1, axis=0))
    acc = acc + jnp.where(h_idx == H - 1, 0.0, pltpu.roll(y2, shift=R - 1, axis=0))

    # Partial BN statistics BEFORE the bias (better E[x^2]-E[x]^2 cancellation).
    sum_ref[...] = jnp.sum(acc, axis=0, keepdims=True)
    sq_ref[...] = jnp.sum(acc * acc, axis=0, keepdims=True)

    o_ref[...] = (acc + b_ref[...]).reshape(nblk, H, Lt)


def conv_bn_stats(x_trl, w_band, bias_c, *, B, T, H, W, Cin, Cout, eps=1e-5,
                  vmem_cap=None):
    """x_trl: (T, B*H, W*Cin) -> (conv_out (T, B*H, W*Cout), scale_l, shift_l).

    scale_l/shift_l (length W*Cout) fold the training-mode BatchNorm3d
    (gamma=1, beta=0, biased batch variance) into the downstream LIF input.
    """
    N = T * B
    K = W * Cin
    Lfull = W * Cout
    cap = _vmem_capacity_bytes() if vmem_cap is None else vmem_cap

    Lt = _pick_lane_tile(Lfull, K, budget_bytes=cap // 8)
    nblk = _pick_nblk(N, H, K, Lt, budget_bytes=cap // 4)
    nwt = Lfull // Lt
    nblocks = N // nblk

    x_nhk = x_trl.reshape(N, H, K)
    b_flat = jnp.tile(bias_c.astype(jnp.float32), W).reshape(1, Lfull)

    flops = 2 * N * H * K * Lfull * 3
    bytes_accessed = (nwt * N * H * K * 4 + 3 * K * Lfull * 2
                      + N * H * Lfull * 4 + 2 * nblocks * Lfull * 4)

    y, psum, psq = pl.pallas_call(
        _conv3x3_bn_kernel,
        out_shape=(jax.ShapeDtypeStruct((N, H, Lfull), jnp.float32),
                   jax.ShapeDtypeStruct((nblocks, Lfull), jnp.float32),
                   jax.ShapeDtypeStruct((nblocks, Lfull), jnp.float32)),
        grid_spec=pltpu.PrefetchScalarGridSpec(
            num_scalar_prefetch=0,
            grid=(nwt, nblocks),                        # wt outer: weight reused
            in_specs=[
                pl.BlockSpec((nblk, H, K), lambda wt, n: (n, 0, 0)),
                pl.BlockSpec((3, K, Lt), lambda wt, n: (0, 0, wt)),
                pl.BlockSpec((1, Lt), lambda wt, n: (0, wt)),
            ],
            out_specs=(
                pl.BlockSpec((nblk, H, Lt), lambda wt, n: (n, 0, wt)),
                pl.BlockSpec((1, Lt), lambda wt, n: (n, wt)),
                pl.BlockSpec((1, Lt), lambda wt, n: (n, wt)),
            ),
        ),
        compiler_params=pltpu.CompilerParams(
            dimension_semantics=("parallel", "parallel"),
            vmem_limit_bytes=_vmem_limit(cap)),
        cost_estimate=pl.CostEstimate(flops=int(flops), transcendentals=0,
                                      bytes_accessed=int(bytes_accessed)),
    )(x_nhk, w_band, b_flat)

    # Finalize BN batch statistics (tiny reduction in JAX). Stats were taken
    # pre-bias; the per-channel bias only shifts the mean (var is shift-invariant).
    cnt = float(N * H * W)
    raw_sum = psum.reshape(nblocks, W, Cout).sum(axis=(0, 1))
    raw_sq = psq.reshape(nblocks, W, Cout).sum(axis=(0, 1))
    raw_mean = raw_sum / cnt
    mean = raw_mean + bias_c.astype(jnp.float32)
    var = jnp.maximum(raw_sq / cnt - raw_mean * raw_mean, 0.0)  # biased (PyTorch)
    inv = lax.rsqrt(var + eps)
    scale_l = jnp.tile(inv, W)                                  # per-lane (W*Cout)
    shift_l = jnp.tile(-mean * inv, W)
    return y.reshape(T, B * H, Lfull), scale_l, shift_l


# ----------------------------------------------------------------------------
# LIF membrane updates (BaseNeuron.mem_update, 5D path). BN affine folded in.
# ----------------------------------------------------------------------------
def _lif_affine_kernel(x_ref, scale_ref, shift_ref, o_ref, *, decay, thresh,
                       unroll):
    """act=False LIF: output = clip(mem, 0, 1); recurrence on UNclamped mem."""
    T, rb, L = x_ref.shape
    # Hoist the (1,L)->(rb,L) broadcasts out of the time loop (no CSE of
    # broadcast_in_dim under unroll=True).
    scale = jnp.broadcast_to(scale_ref[...], (rb, L))
    shift = jnp.broadcast_to(shift_ref[...], (rb, L))

    mem = x_ref[0] * scale + shift
    spike = (mem > thresh).astype(jnp.float32)
    o_ref[0] = jnp.clip(mem, 0.0, 1.0)

    def body(t, carry):
        mem, spike = carry
        mem = mem * decay * (1.0 - spike) + (x_ref[t] * scale + shift)
        spike = (mem > thresh).astype(jnp.float32)
        o_ref[t] = jnp.clip(mem, 0.0, 1.0)
        return mem, spike

    lax.fori_loop(1, T, body, (mem, spike), unroll=unroll)
    # TODO(synk): tile the lane dim in-kernel when the carried state exceeds the
    # vreg file (per-lane recurrences are independent).


def _lif_fused_kernel(x_ref, res_ref, scale_ref, shift_ref, o_ref, *, decay,
                      thresh, unroll):
    """Fused cv2 LIF (act=False) + block-level residual LIF (act=True).

    Per t: y2_t = clip(mem2_t, 0, 1) is computed in-register and fed (with the
    residual) into the second recurrence; only the final binary spikes are
    stored, eliminating the y2 HBM round trip.
    """
    T, rb, L = x_ref.shape
    scale = jnp.broadcast_to(scale_ref[...], (rb, L))
    shift = jnp.broadcast_to(shift_ref[...], (rb, L))

    mem2 = x_ref[0] * scale + shift
    spike2 = (mem2 > thresh).astype(jnp.float32)
    mem3 = jnp.clip(mem2, 0.0, 1.0) + res_ref[0]
    spike3 = (mem3 > thresh).astype(jnp.float32)
    o_ref[0] = spike3                        # act=True: clamp is a no-op on {0,1}

    def body(t, carry):
        mem2, spike2, mem3, spike3 = carry
        mem2 = mem2 * decay * (1.0 - spike2) + (x_ref[t] * scale + shift)
        spike2 = (mem2 > thresh).astype(jnp.float32)
        y2 = jnp.clip(mem2, 0.0, 1.0)        # cv2 output (act=False, clamped)
        mem3 = mem3 * decay * (1.0 - spike3) + (y2 + res_ref[t])
        spike3 = (mem3 > thresh).astype(jnp.float32)
        o_ref[t] = spike3
        return mem2, spike2, mem3, spike3

    lax.fori_loop(1, T, body, (mem2, spike2, mem3, spike3), unroll=unroll)


def _lif_call(kernel, inputs, T, R, L, rb, cap, n_big):
    data_spec = pl.BlockSpec((T, rb, L), lambda r: (0, r, 0))
    vec_spec = pl.BlockSpec((1, L), lambda r: (0, 0))
    in_specs = [data_spec] * n_big + [vec_spec, vec_spec]
    flops = 6 * T * R * L
    bytes_accessed = (n_big + 1) * T * R * L * 4 + 2 * L * 4
    return pl.pallas_call(
        kernel,
        out_shape=jax.ShapeDtypeStruct((T, R, L), jnp.float32),
        grid_spec=pltpu.PrefetchScalarGridSpec(
            num_scalar_prefetch=0, grid=(R // rb,),
            in_specs=in_specs, out_specs=data_spec),
        compiler_params=pltpu.CompilerParams(
            dimension_semantics=("parallel",),
            vmem_limit_bytes=_vmem_limit(cap)),
        cost_estimate=pl.CostEstimate(flops=int(flops), transcendentals=0,
                                      bytes_accessed=int(bytes_accessed)),
    )(*inputs)


def lif_affine(x_trl, scale_l, shift_l, *, decay, thresh, vmem_cap=None):
    T, R, L = x_trl.shape
    cap = _vmem_capacity_bytes() if vmem_cap is None else vmem_cap
    rb = _pick_row_block(R, T, L, n_big_inputs=1, budget_bytes=cap // 4)
    unroll = (T <= 16) and (2 * rb * L * 4 <= 64 * 1024)
    kernel = functools.partial(_lif_affine_kernel, decay=float(decay),
                               thresh=float(thresh), unroll=unroll)
    return _lif_call(kernel,
                     [x_trl, scale_l.reshape(1, L), shift_l.reshape(1, L)],
                     T, R, L, rb, cap, n_big=1)


def lif_fused_residual(x_trl, res_trl, scale_l, shift_l, *, decay, thresh,
                       vmem_cap=None):
    T, R, L = x_trl.shape
    cap = _vmem_capacity_bytes() if vmem_cap is None else vmem_cap
    rb = _pick_row_block(R, T, L, n_big_inputs=2, budget_bytes=cap // 4)
    unroll = (T <= 16) and (4 * rb * L * 4 <= 64 * 1024)
    kernel = functools.partial(_lif_fused_kernel, decay=float(decay),
                               thresh=float(thresh), unroll=unroll)
    return _lif_call(kernel,
                     [x_trl, res_trl, scale_l.reshape(1, L),
                      shift_l.reshape(1, L)],
                     T, R, L, rb, cap, n_big=2)


# ----------------------------------------------------------------------------
# Full LIAFResBlock forward.
# ----------------------------------------------------------------------------
def liaf_resblock_forward(x_bcthw, params):
    B, C, T, H, W = x_bcthw.shape
    thresh = 0.5
    decay = 1.0 / (1.0 + math.exp(-0.5))     # sigmoid(decay_param = 0.5)
    L = W * C
    cap = _vmem_capacity_bytes()

    # Single entry transpose to the canonical (T, B*H, W*C) layout; every other
    # inter-stage layout change is a free reshape.
    x_trl = x_bcthw.transpose(2, 0, 3, 4, 1).reshape(T, B * H, L)

    # --- cv1: conv + BN stats -> mem_update(act=False) ---
    s1, sc1, sh1 = conv_bn_stats(x_trl, params["w1"], params["b1"],
                                 B=B, T=T, H=H, W=W, Cin=C, Cout=C, vmem_cap=cap)
    y1 = lif_affine(s1, sc1, sh1, decay=decay, thresh=thresh, vmem_cap=cap)

    # --- cv2: conv + BN stats; its LIF is fused with the block-level LIF ---
    s2, sc2, sh2 = conv_bn_stats(y1, params["w2"], params["b2"],
                                 B=B, T=T, H=H, W=W, Cin=C, Cout=C, vmem_cap=cap)
    out_trl = lif_fused_residual(s2, x_trl, sc2, sh2, decay=decay, thresh=thresh,
                                 vmem_cap=cap)

    # Single exit transpose back to (B, C, T, H, W).
    return out_trl.reshape(T, B, H, W, C).transpose(1, 4, 0, 2, 3)


# ----------------------------------------------------------------------------
# Pure-JAX reference (numerical sanity checks).
# ----------------------------------------------------------------------------
def _ref_conv_t(x5, w_oihw, b):
    B, C, T, H, W = x5.shape
    ys = []
    for t in range(T):
        y = lax.conv_general_dilated(
            x5[:, :, t], w_oihw, (1, 1), ((1, 1), (1, 1)),
            dimension_numbers=("NCHW", "OIHW", "NCHW"))
        ys.append(y + b[None, :, None, None])
    return jnp.stack(ys, axis=2)


def _ref_bn(x5, eps=1e-5):
    mean = jnp.mean(x5, axis=(0, 2, 3, 4), keepdims=True)
    var = jnp.var(x5, axis=(0, 2, 3, 4), keepdims=True)
    return (x5 - mean) / jnp.sqrt(var + eps)


def _ref_mem_update(x5, act, decay, thresh):
    T = x5.shape[2]
    outs, mem, spike = [], None, None
    for t in range(T):
        xt = x5[:, :, t]
        mem = xt if t == 0 else mem * decay * (1.0 - spike) + xt
        spike = (mem > thresh).astype(jnp.float32)
        outs.append(spike if act else mem)
    return jnp.clip(jnp.stack(outs, axis=2), 0.0, 1.0)


def reference_forward(x, w1_oihw, b1, w2_oihw, b2):
    decay = 1.0 / (1.0 + math.exp(-0.5))
    thresh = 0.5
    y1 = _ref_mem_update(_ref_bn(_ref_conv_t(x, w1_oihw, b1)), False, decay, thresh)
    y2 = _ref_mem_update(_ref_bn(_ref_conv_t(y1, w2_oihw, b2)), False, decay, thresh)
    return _ref_mem_update(y2 + x, True, decay, thresh)


if __name__ == "__main__":
    B, C, T, H, W = 2, 8, 4, 8, 8          # inChannels == outChannels -> no downsample
    key = jax.random.PRNGKey(0)
    k1, k2, k3 = jax.random.split(key, 3)

    x = jax.random.normal(k1, (B, C, T, H, W), jnp.float32)

    # Conv2d params: kaiming-style weights, bias = 0.5 (per paramInit)
    std = math.sqrt(2.0 / (C * 3 * 3))
    w1_oihw = std * jax.random.normal(k2, (C, C, 3, 3), jnp.float32)
    w2_oihw = std * jax.random.normal(k3, (C, C, 3, 3), jnp.float32)
    b1 = jnp.full((C,), 0.5, jnp.float32)
    b2 = jnp.full((C,), 0.5, jnp.float32)

    params = {
        "w1": band_conv_weights(w1_oihw, W),   # (3, W*C, W*C) bf16 band
        "b1": b1,                              # per-channel bias (C,)
        "w2": band_conv_weights(w2_oihw, W),
        "b2": b2,
    }

    fwd = jax.jit(liaf_resblock_forward)
    out = jax.block_until_ready(fwd(x, params))
    assert out.shape == (B, C, T, H, W) and out.dtype == jnp.float32

    # Sanity check 1: banded bf16 conv + fused BN stats vs f32 lax.conv.
    x_trl = x.transpose(2, 0, 3, 4, 1).reshape(T, B * H, W * C)
    s1, sc1, sh1 = conv_bn_stats(x_trl, params["w1"], params["b1"],
                                 B=B, T=T, H=H, W=W, Cin=C, Cout=C)
    s1_pal = s1.reshape(T, B, H, W, C).transpose(1, 4, 0, 2, 3)
    s1_ref = _ref_conv_t(x, w1_oihw, b1)
    assert float(jnp.max(jnp.abs(s1_pal - s1_ref))) < 5e-2   # bf16 MXU operands

    mean_ref = jnp.mean(s1_ref, axis=(0, 2, 3, 4))
    var_ref = jnp.var(s1_ref, axis=(0, 2, 3, 4))
    inv_ref = 1.0 / jnp.sqrt(var_ref + 1e-5)
    assert float(jnp.max(jnp.abs(sc1[:C] - inv_ref))) < 2e-2
    assert float(jnp.max(jnp.abs(sh1[:C] + mean_ref * inv_ref))) < 2e-2

    # Sanity check 2: end-to-end spikes vs pure-JAX f32 reference (lenient — rare
    # threshold-boundary flips from bf16 operands / reassociation are tolerated).
    ref = reference_forward(x, w1_oihw, b1, w2_oihw, b2)
    mismatch_frac = float(jnp.mean((jnp.abs(out - ref) > 0.5).astype(jnp.float32)))
    assert mismatch_frac < 0.06

    print("KERNEL_OK")
</pallas_src>

<mosaic_0001>
module attributes {stable_mosaic.version = 11 : i64} {
  func.func @_conv3x3_bn_kernel(%arg0: i32, %arg1: i32, %arg2: memref<8x8x64xf32, #tpu.memory_space<vmem>>, %arg3: memref<3x64x64xbf16, #tpu.memory_space<vmem>>, %arg4: memref<1x64xf32, #tpu.memory_space<vmem>>, %arg5: memref<8x8x64xf32, #tpu.memory_space<vmem>>, %arg6: memref<1x64xf32, #tpu.memory_space<vmem>>, %arg7: memref<1x64xf32, #tpu.memory_space<vmem>>) attributes {dimension_semantics = [#tpu.dimension_semantics<parallel>, #tpu.dimension_semantics<parallel>], iteration_bounds = array<i64: 1, 1>, scalar_prefetch = 0 : i64, scratch_operands = 0 : i64, tpu.core_type = #tpu.core_type<tc>, window_params = [{transform_indices = @transform_0, window_bounds = array<i64: 8, 8, 64>}, {transform_indices = @transform_1, window_bounds = array<i64: 3, 64, 64>}, {transform_indices = @transform_2, window_bounds = array<i64: 1, 64>}, {transform_indices = @transform_3, window_bounds = array<i64: 8, 8, 64>}, {transform_indices = @transform_4, window_bounds = array<i64: 1, 64>}, {transform_indices = @transform_5, window_bounds = array<i64: 1, 64>}]} {
    %c0 = arith.constant 0 : index
    %c0_0 = arith.constant 0 : index
    %c0_1 = arith.constant 0 : index
    %0 = vector.load %arg2[%c0, %c0_0, %c0_1] : memref<8x8x64xf32, #tpu.memory_space<vmem>>, vector<8x8x64xf32>
    %1 = vector.shape_cast %0 : vector<8x8x64xf32> to vector<64x64xf32>
    %2 = arith.truncf %1 : vector<64x64xf32> to vector<64x64xbf16>
    %c0_2 = arith.constant 0 : index
    %c0_3 = arith.constant 0 : index
    %c0_4 = arith.constant 0 : index
    %3 = vector.load %arg3[%c0_2, %c0_3, %c0_4] : memref<3x64x64xbf16, #tpu.memory_space<vmem>>, vector<1x64x64xbf16>
    %4 = vector.shape_cast %3 : vector<1x64x64xbf16> to vector<64x64xbf16>
    %cst = arith.constant dense<0.000000e+00> : vector<64x64xf32>
    %5 = tpu.matmul %2, %4, %cst {dimension_numbers = #tpu.dot_dimension_numbers<[1], [0], [0], [1], [0, 0, 1, 1], [], []>} : vector<64x64xbf16>, vector<64x64xbf16>, vector<64x64xf32> -> vector<64x64xf32>
    %c1 = arith.constant 1 : index
    %c0_5 = arith.constant 0 : index
    %c0_6 = arith.constant 0 : index
    %6 = vector.load %arg3[%c1, %c0_5, %c0_6] : memref<3x64x64xbf16, #tpu.memory_space<vmem>>, vector<1x64x64xbf16>
    %7 = vector.shape_cast %6 : vector<1x64x64xbf16> to vector<64x64xbf16>
    %cst_7 = arith.constant dense<0.000000e+00> : vector<64x64xf32>
    %8 = tpu.matmul %2, %7, %cst_7 {dimension_numbers = #tpu.dot_dimension_numbers<[1], [0], [0], [1], [0, 0, 1, 1], [], []>} : vector<64x64xbf16>, vector<64x64xbf16>, vector<64x64xf32> -> vector<64x64xf32>
    %c2 = arith.constant 2 : index
    %c0_8 = arith.constant 0 : index
    %c0_9 = arith.constant 0 : index
    %9 = vector.load %arg3[%c2, %c0_8, %c0_9] : memref<3x64x64xbf16, #tpu.memory_space<vmem>>, vector<1x64x64xbf16>
    %10 = vector.shape_cast %9 : vector<1x64x64xbf16> to vector<64x64xbf16>
    %cst_10 = arith.constant dense<0.000000e+00> : vector<64x64xf32>
    %11 = tpu.matmul %2, %10, %cst_10 {dimension_numbers = #tpu.dot_dimension_numbers<[1], [0], [0], [1], [0, 0, 1, 1], [], []>} : vector<64x64xbf16>, vector<64x64xbf16>, vector<64x64xf32> -> vector<64x64xf32>
    %12 = tpu.iota {dimensions = array<i32: 1>} : vector<8x8x64xi32>
    %13 = vector.shape_cast %12 : vector<8x8x64xi32> to vector<64x64xi32>
    %c0_i32 = arith.constant 0 : i32
    %14 = vector.broadcast %c0_i32 : i32 to vector<64x64xi32>
    %15 = arith.cmpi eq, %13, %14 : vector<64x64xi32>
    %c1_i32 = arith.constant 1 : i32
    %16 = tpu.dynamic_rotate %5 by %c1_i32 dim 0 : vector<64x64xf32>, i32 -> vector<64x64xf32>
    %cst_11 = arith.constant 0.000000e+00 : f32
    %17 = vector.broadcast %cst_11 : f32 to vector<64x64xf32>
    %18 = arith.select %15, %17, %16 : vector<64x64xi1>, vector<64x64xf32>
    %19 = arith.addf %8, %18 : vector<64x64xf32>
    %c7_i32 = arith.constant 7 : i32
    %20 = vector.broadcast %c7_i32 : i32 to vector<64x64xi32>
    %21 = arith.cmpi eq, %13, %20 : vector<64x64xi32>
    %c63_i32 = arith.constant 63 : i32
    %22 = tpu.dynamic_rotate %11 by %c63_i32 dim 0 : vector<64x64xf32>, i32 -> vector<64x64xf32>
    %cst_12 = arith.constant 0.000000e+00 : f32
    %23 = vector.broadcast %cst_12 : f32 to vector<64x64xf32>
    %24 = arith.select %21, %23, %22 : vector<64x64xi1>, vector<64x64xf32>
    %25 = arith.addf %19, %24 : vector<64x64xf32>
    %cst_13 = arith.constant dense<0.000000e+00> : vector<64xf32>
    %26 = vector.multi_reduction <add>, %25, %cst_13 [0] : vector<64x64xf32> to vector<64xf32>
    %27 = vector.shape_cast %26 : vector<64xf32> to vector<1x64xf32>
    %c0_14 = arith.constant 0 : index
    %c0_15 = arith.constant 0 : index
    %28 = vector.load %arg6[%c0_14, %c0_15] : memref<1x64xf32, #tpu.memory_space<vmem>>, vector<1x64xf32>
    tpu.vector_store %arg6[%c0_14, %c0_15], %27 {strides = array<i32>} : memref<1x64xf32, #tpu.memory_space<vmem>>, vector<1x64xf32>,
    %29 = arith.mulf %25, %25 : vector<64x64xf32>
    %cst_16 = arith.constant dense<0.000000e+00> : vector<64xf32>
    %30 = vector.multi_reduction <add>, %29, %cst_16 [0] : vector<64x64xf32> to vector<64xf32>
    %31 = vector.shape_cast %30 : vector<64xf32> to vector<1x64xf32>
    %c0_17 = arith.constant 0 : index
    %c0_18 = arith.constant 0 : index
    %32 = vector.load %arg7[%c0_17, %c0_18] : memref<1x64xf32, #tpu.memory_space<vmem>>, vector<1x64xf32>
    tpu.vector_store %arg7[%c0_17, %c0_18], %31 {strides = array<i32>} : memref<1x64xf32, #tpu.memory_space<vmem>>, vector<1x64xf32>,
    %c0_19 = arith.constant 0 : index
    %c0_20 = arith.constant 0 : index
    %33 = vector.load %arg4[%c0_19, %c0_20] : memref<1x64xf32, #tpu.memory_space<vmem>>, vector<1x64xf32>
    %34 = vector.broadcast %33 : vector<1x64xf32> to vector<64x64xf32>
    %35 = arith.addf %25, %34 : vector<64x64xf32>
    %36 = vector.shape_cast %35 : vector<64x64xf32> to vector<8x8x64xf32>
    %c0_21 = arith.constant 0 : index
    %c0_22 = arith.constant 0 : index
    %c0_23 = arith.constant 0 : index
    %37 = vector.load %arg5[%c0_21, %c0_22, %c0_23] : memref<8x8x64xf32, #tpu.memory_space<vmem>>, vector<8x8x64xf32>
    tpu.vector_store %arg5[%c0_21, %c0_22, %c0_23], %36 {strides = array<i32>} : memref<8x8x64xf32, #tpu.memory_space<vmem>>, vector<8x8x64xf32>,
    return
  }
  func.func @transform_0(%arg0: i32, %arg1: i32) -> (i32, i32, i32) {
    %c0_i32 = arith.constant 0 : i32
    %c0_i32_0 = arith.constant 0 : i32
    %c0_i32_1 = arith.constant 0 : i32
    return %arg1, %c0_i32, %c0_i32_0 : i32, i32, i32
  }
  func.func @transform_1(%arg0: i32, %arg1: i32) -> (i32, i32, i32) {
    %c0_i32 = arith.constant 0 : i32
    %c0_i32_0 = arith.constant 0 : i32
    %c0_i32_1 = arith.constant 0 : i32
    return %c0_i32, %c0_i32_0, %arg0 : i32, i32, i32
  }
  func.func @transform_2(%arg0: i32, %arg1: i32) -> (i32, i32) {
    %c0_i32 = arith.constant 0 : i32
    %c0_i32_0 = arith.constant 0 : i32
    return %c0_i32, %arg0 : i32, i32
  }
  func.func @transform_3(%arg0: i32, %arg1: i32) -> (i32, i32, i32) {
    %c0_i32 = arith.constant 0 : i32
    %c0_i32_0 = arith.constant 0 : i32
    return %arg1, %c0_i32, %arg0 : i32, i32, i32
  }
  func.func @transform_4(%arg0: i32, %arg1: i32) -> (i32, i32) {
    %c0_i32 = arith.constant 0 : i32
    return %arg1, %arg0 : i32, i32
  }
  func.func @transform_5(%arg0: i32, %arg1: i32) -> (i32, i32) {
    %c0_i32 = arith.constant 0 : i32
    return %arg1, %arg0 : i32, i32
  }
}

module attributes {stable_mosaic.version = 11 : i64} {
  func.func @_lif_fused_kernel(%arg0: i32, %arg1: memref<4x8x64xf32, #tpu.memory_space<vmem>>, %arg2: memref<4x8x64xf32, #tpu.memory_space<vmem>>, %arg3: memref<1x64xf32, #tpu.memory_space<vmem>>, %arg4: memref<1x64xf32, #tpu.memory_space<vmem>>, %arg5: memref<4x8x64xf32, #tpu.memory_space<vmem>>) attributes {dimension_semantics = [#tpu.dimension_semantics<parallel>], iteration_bounds = array<i64: 2>, scalar_prefetch = 0 : i64, scratch_operands = 0 : i64, tpu.core_type = #tpu.core_type<tc>, window_params = [{transform_indices = @transform_0, window_bounds = array<i64: 4, 8, 64>}, {transform_indices = @transform_1, window_bounds = array<i64: 4, 8, 64>}, {pipeline_mode = #tpu.pipeline_mode<synchronous>, transform_indices = @transform_2, window_bounds = array<i64: 1, 64>}, {pipeline_mode = #tpu.pipeline_mode<synchronous>, transform_indices = @transform_3, window_bounds = array<i64: 1, 64>}, {transform_indices = @transform_4, window_bounds = array<i64: 4, 8, 64>}]} {
    %c0 = arith.constant 0 : index
    %c0_0 = arith.constant 0 : index
    %0 = vector.load %arg3[%c0, %c0_0] : memref<1x64xf32, #tpu.memory_space<vmem>>, vector<1x64xf32>
    %1 = vector.shape_cast %0 : vector<1x64xf32> to vector<1x64xf32>
    %2 = vector.broadcast %1 : vector<1x64xf32> to vector<8x64xf32>
    %c0_1 = arith.constant 0 : index
    %c0_2 = arith.constant 0 : index
    %3 = vector.load %arg4[%c0_1, %c0_2] : memref<1x64xf32, #tpu.memory_space<vmem>>, vector<1x64xf32>
    %4 = vector.shape_cast %3 : vector<1x64xf32> to vector<1x64xf32>
    %5 = vector.broadcast %4 : vector<1x64xf32> to vector<8x64xf32>
    %c0_3 = arith.constant 0 : index
    %c0_4 = arith.constant 0 : index
    %c0_5 = arith.constant 0 : index
    %6 = vector.load %arg1[%c0_3, %c0_4, %c0_5] : memref<4x8x64xf32, #tpu.memory_space<vmem>>, vector<1x8x64xf32>
    %7 = vector.shape_cast %6 : vector<1x8x64xf32> to vector<8x64xf32>
    %8 = arith.mulf %7, %2 : vector<8x64xf32>
    %9 = arith.addf %8, %5 : vector<8x64xf32>
    %cst = arith.constant 5.000000e-01 : f32
    %10 = vector.broadcast %cst : f32 to vector<8x64xf32>
    %11 = arith.cmpf ogt, %9, %10 : vector<8x64xf32>
    %12 = arith.extui %11 : vector<8x64xi1> to vector<8x64xi32>
    %13 = arith.sitofp %12 : vector<8x64xi32> to vector<8x64xf32>
    %cst_6 = arith.constant 0.000000e+00 : f32
    %cst_7 = arith.constant 1.000000e+00 : f32
    %14 = vector.broadcast %cst_6 : f32 to vector<8x64xf32>
    %15 = arith.maximumf %14, %9 : vector<8x64xf32>
    %16 = vector.broadcast %cst_7 : f32 to vector<8x64xf32>
    %17 = arith.minimumf %16, %15 : vector<8x64xf32>
    %c0_8 = arith.constant 0 : index
    %c0_9 = arith.constant 0 : index
    %c0_10 = arith.constant 0 : index
    %18 = vector.load %arg2[%c0_8, %c0_9, %c0_10] : memref<4x8x64xf32, #tpu.memory_space<vmem>>, vector<1x8x64xf32>
    %19 = vector.shape_cast %18 : vector<1x8x64xf32> to vector<8x64xf32>
    %20 = arith.addf %17, %19 : vector<8x64xf32>
    %cst_11 = arith.constant 5.000000e-01 : f32
    %21 = vector.broadcast %cst_11 : f32 to vector<8x64xf32>
    %22 = arith.cmpf ogt, %20, %21 : vector<8x64xf32>
    %23 = arith.extui %22 : vector<8x64xi1> to vector<8x64xi32>
    %24 = arith.sitofp %23 : vector<8x64xi32> to vector<8x64xf32>
    %c0_12 = arith.constant 0 : index
    %c0_13 = arith.constant 0 : index
    %c0_14 = arith.constant 0 : index
    %25 = vector.load %arg5[%c0_12, %c0_13, %c0_14] : memref<4x8x64xf32, #tpu.memory_space<vmem>>, vector<1x8x64xf32>
    %26 = vector.shape_cast %25 : vector<1x8x64xf32> to vector<8x64xf32>
    %27 = vector.shape_cast %24 : vector<8x64xf32> to vector<1x8x64xf32>
    tpu.vector_store %arg5[%c0_12, %c0_13, %c0_14], %27 {strides = array<i32>} : memref<4x8x64xf32, #tpu.memory_space<vmem>>, vector<1x8x64xf32>,
    %c1_i32 = arith.constant 1 : i32
    %cst_15 = arith.constant 0.622459352 : f32
    %28 = vector.broadcast %cst_15 : f32 to vector<8x64xf32>
    %29 = arith.mulf %9, %28 : vector<8x64xf32>
    %cst_16 = arith.constant 1.000000e+00 : f32
    %30 = vector.broadcast %cst_16 : f32 to vector<8x64xf32>
    %31 = arith.subf %30, %13 : vector<8x64xf32>
    %32 = arith.mulf %29, %31 : vector<8x64xf32>
    %33 = arith.index_cast %c1_i32 : i32 to index
    %c0_17 = arith.constant 0 : index
    %c0_18 = arith.constant 0 : index
    %34 = vector.load %arg1[%33, %c0_17, %c0_18] : memref<4x8x64xf32, #tpu.memory_space<vmem>>, vector<1x8x64xf32>
    %35 = vector.shape_cast %34 : vector<1x8x64xf32> to vector<8x64xf32>
    %36 = arith.mulf %35, %2 : vector<8x64xf32>
    %37 = arith.addf %36, %5 : vector<8x64xf32>
    %38 = arith.addf %32, %37 : vector<8x64xf32>
    %cst_19 = arith.constant 5.000000e-01 : f32
    %39 = vector.broadcast %cst_19 : f32 to vector<8x64xf32>
    %40 = arith.cmpf ogt, %38, %39 : vector<8x64xf32>
    %41 = arith.extui %40 : vector<8x64xi1> to vector<8x64xi32>
    %42 = arith.sitofp %41 : vector<8x64xi32> to vector<8x64xf32>
    %cst_20 = arith.constant 0.000000e+00 : f32
    %cst_21 = arith.constant 1.000000e+00 : f32
    %43 = vector.broadcast %cst_20 : f32 to vector<8x64xf32>
    %44 = arith.maximumf %43, %38 : vector<8x64xf32>
    %45 = vector.broadcast %cst_21 : f32 to vector<8x64xf32>
    %46 = arith.minimumf %45, %44 : vector<8x64xf32>
    %cst_22 = arith.constant 0.622459352 : f32
    %47 = vector.broadcast %cst_22 : f32 to vector<8x64xf32>
    %48 = arith.mulf %20, %47 : vector<8x64xf32>
    %cst_23 = arith.constant 1.000000e+00 : f32
    %49 = vector.broadcast %cst_23 : f32 to vector<8x64xf32>
    %50 = arith.subf %49, %24 : vector<8x64xf32>
    %51 = arith.mulf %48, %50 : vector<8x64xf32>
    %52 = arith.index_cast %c1_i32 : i32 to index
    %c0_24 = arith.constant 0 : index
    %c0_25 = arith.constant 0 : index
    %53 = vector.load %arg2[%52, %c0_24, %c0_25] : memref<4x8x64xf32, #tpu.memory_space<vmem>>, vector<1x8x64xf32>
    %54 = vector.shape_cast %53 : vector<1x8x64xf32> to vector<8x64xf32>
    %55 = arith.addf %46, %54 : vector<8x64xf32>
    %56 = arith.addf %51, %55 : vector<8x64xf32>
    %cst_26 = arith.constant 5.000000e-01 : f32
    %57 = vector.broadcast %cst_26 : f32 to vector<8x64xf32>
    %58 = arith.cmpf ogt, %56, %57 : vector<8x64xf32>
    %59 = arith.extui %58 : vector<8x64xi1> to vector<8x64xi32>
    %60 = arith.sitofp %59 : vector<8x64xi32> to vector<8x64xf32>
    %61 = arith.index_cast %c1_i32 : i32 to index
    %c0_27 = arith.constant 0 : index
    %c0_28 = arith.constant 0 : index
    %62 = vector.load %arg5[%61, %c0_27, %c0_28] : memref<4x8x64xf32, #tpu.memory_space<vmem>>, vector<1x8x64xf32>
    %63 = vector.shape_cast %62 : vector<1x8x64xf32> to vector<8x64xf32>
    %64 = vector.shape_cast %60 : vector<8x64xf32> to vector<1x8x64xf32>
    tpu.vector_store %arg5[%61, %c0_27, %c0_28], %64 {strides = array<i32>} : memref<4x8x64xf32, #tpu.memory_space<vmem>>, vector<1x8x64xf32>,
    %c2_i32 = arith.constant 2 : i32
    %cst_29 = arith.constant 0.622459352 : f32
    %65 = vector.broadcast %cst_29 : f32 to vector<8x64xf32>
    %66 = arith.mulf %38, %65 : vector<8x64xf32>
    %cst_30 = arith.constant 1.000000e+00 : f32
    %67 = vector.broadcast %cst_30 : f32 to vector<8x64xf32>
    %68 = arith.subf %67, %42 : vector<8x64xf32>
    %69 = arith.mulf %66, %68 : vector<8x64xf32>
    %70 = arith.index_cast %c2_i32 : i32 to index
    %c0_31 = arith.constant 0 : index
    %c0_32 = arith.constant 0 : index
    %71 = vector.load %arg1[%70, %c0_31, %c0_32] : memref<4x8x64xf32, #tpu.memory_space<vmem>>, vector<1x8x64xf32>
    %72 = vector.shape_cast %71 : vector<1x8x64xf32> to vector<8x64xf32>
    %73 = arith.mulf %72, %2 : vector<8x64xf32>
    %74 = arith.addf %73, %5 : vector<8x64xf32>
    %75 = arith.addf %69, %74 : vector<8x64xf32>
    %cst_33 = arith.constant 5.000000e-01 : f32
    %76 = vector.broadcast %cst_33 : f32 to vector<8x64xf32>
    %77 = arith.cmpf ogt, %75, %76 : vector<8x64xf32>
    %78 = arith.extui %77 : vector<8x64xi1> to vector<8x64xi32>
    %79 = arith.sitofp %78 : vector<8x64xi32> to vector<8x64xf32>
    %cst_34 = arith.constant 0.000000e+00 : f32
    %cst_35 = arith.constant 1.000000e+00 : f32
    %80 = vector.broadcast %cst_34 : f32 to vector<8x64xf32>
    %81 = arith.maximumf %80, %75 : vector<8x64xf32>
    %82 = vector.broadcast %cst_35 : f32 to vector<8x64xf32>
    %83 = arith.minimumf %82, %81 : vector<8x64xf32>
    %cst_36 = arith.constant 0.622459352 : f32
    %84 = vector.broadcast %cst_36 : f32 to vector<8x64xf32>
    %85 = arith.mulf %56, %84 : vector<8x64xf32>
    %cst_37 = arith.constant 1.000000e+00 : f32
    %86 = vector.broadcast %cst_37 : f32 to vector<8x64xf32>
    %87 = arith.subf %86, %60 : vector<8x64xf32>
    %88 = arith.mulf %85, %87 : vector<8x64xf32>
    %89 = arith.index_cast %c2_i32 : i32 to index
    %c0_38 = arith.constant 0 : index
    %c0_39 = arith.constant 0 : index
    %90 = vector.load %arg2[%89, %c0_38, %c0_39] : memref<4x8x64xf32, #tpu.memory_space<vmem>>, vector<1x8x64xf32>
    %91 = vector.shape_cast %90 : vector<1x8x64xf32> to vector<8x64xf32>
    %92 = arith.addf %83, %91 : vector<8x64xf32>
    %93 = arith.addf %88, %92 : vector<8x64xf32>
    %cst_40 = arith.constant 5.000000e-01 : f32
    %94 = vector.broadcast %cst_40 : f32 to vector<8x64xf32>
    %95 = arith.cmpf ogt, %93, %94 : vector<8x64xf32>
    %96 = arith.extui %95 : vector<8x64xi1> to vector<8x64xi32>
    %97 = arith.sitofp %96 : vector<8x64xi32> to vector<8x64xf32>
    %98 = arith.index_cast %c2_i32 : i32 to index
    %c0_41 = arith.constant 0 : index
    %c0_42 = arith.constant 0 : index
    %99 = vector.load %arg5[%98, %c0_41, %c0_42] : memref<4x8x64xf32, #tpu.memory_space<vmem>>, vector<1x8x64xf32>
    %100 = vector.shape_cast %99 : vector<1x8x64xf32> to vector<8x64xf32>
    %101 = vector.shape_cast %97 : vector<8x64xf32> to vector<1x8x64xf32>
    tpu.vector_store %arg5[%98, %c0_41, %c0_42], %101 {strides = array<i32>} : memref<4x8x64xf32, #tpu.memory_space<vmem>>, vector<1x8x64xf32>,
    %c3_i32 = arith.constant 3 : i32
    %cst_43 = arith.constant 0.622459352 : f32
    %102 = vector.broadcast %cst_43 : f32 to vector<8x64xf32>
    %103 = arith.mulf %75, %102 : vector<8x64xf32>
    %cst_44 = arith.constant 1.000000e+00 : f32
    %104 = vector.broadcast %cst_44 : f32 to vector<8x64xf32>
    %105 = arith.subf %104, %79 : vector<8x64xf32>
    %106 = arith.mulf %103, %105 : vector<8x64xf32>
    %107 = arith.index_cast %c3_i32 : i32 to index
    %c0_45 = arith.constant 0 : index
    %c0_46 = arith.constant 0 : index
    %108 = vector.load %arg1[%107, %c0_45, %c0_46] : memref<4x8x64xf32, #tpu.memory_space<vmem>>, vector<1x8x64xf32>
    %109 = vector.shape_cast %108 : vector<1x8x64xf32> to vector<8x64xf32>
    %110 = arith.mulf %109, %2 : vector<8x64xf32>
    %111 = arith.addf %110, %5 : vector<8x64xf32>
    %112 = arith.addf %106, %111 : vector<8x64xf32>
    %cst_47 = arith.constant 5.000000e-01 : f32
    %113 = vector.broadcast %cst_47 : f32 to vector<8x64xf32>
    %114 = arith.cmpf ogt, %112, %113 : vector<8x64xf32>
    %115 = arith.extui %114 : vector<8x64xi1> to vector<8x64xi32>
    %116 = arith.sitofp %115 : vector<8x64xi32> to vector<8x64xf32>
    %cst_48 = arith.constant 0.000000e+00 : f32
    %cst_49 = arith.constant 1.000000e+00 : f32
    %117 = vector.broadcast %cst_48 : f32 to vector<8x64xf32>
    %118 = arith.maximumf %117, %112 : vector<8x64xf32>
    %119 = vector.broadcast %cst_49 : f32 to vector<8x64xf32>
    %120 = arith.minimumf %119, %118 : vector<8x64xf32>
    %cst_50 = arith.constant 0.622459352 : f32
    %121 = vector.broadcast %cst_50 : f32 to vector<8x64xf32>
    %122 = arith.mulf %93, %121 : vector<8x64xf32>
    %cst_51 = arith.constant 1.000000e+00 : f32
    %123 = vector.broadcast %cst_51 : f32 to vector<8x64xf32>
    %124 = arith.subf %123, %97 : vector<8x64xf32>
    %125 = arith.mulf %122, %124 : vector<8x64xf32>
    %126 = arith.index_cast %c3_i32 : i32 to index
    %c0_52 = arith.constant 0 : index
    %c0_53 = arith.constant 0 : index
    %127 = vector.load %arg2[%126, %c0_52, %c0_53] : memref<4x8x64xf32, #tpu.memory_space<vmem>>, vector<1x8x64xf32>
    %128 = vector.shape_cast %127 : vector<1x8x64xf32> to vector<8x64xf32>
    %129 = arith.addf %120, %128 : vector<8x64xf32>
    %130 = arith.addf %125, %129 : vector<8x64xf32>
    %cst_54 = arith.constant 5.000000e-01 : f32
    %131 = vector.broadcast %cst_54 : f32 to vector<8x64xf32>
    %132 = arith.cmpf ogt, %130, %131 : vector<8x64xf32>
    %133 = arith.extui %132 : vector<8x64xi1> to vector<8x64xi32>
    %134 = arith.sitofp %133 : vector<8x64xi32> to vector<8x64xf32>
    %135 = arith.index_cast %c3_i32 : i32 to index
    %c0_55 = arith.constant 0 : index
    %c0_56 = arith.constant 0 : index
    %136 = vector.load %arg5[%135, %c0_55, %c0_56] : memref<4x8x64xf32, #tpu.memory_space<vmem>>, vector<1x8x64xf32>
    %137 = vector.shape_cast %136 : vector<1x8x64xf32> to vector<8x64xf32>
    %138 = vector.shape_cast %134 : vector<8x64xf32> to vector<1x8x64xf32>
    tpu.vector_store %arg5[%135, %c0_55, %c0_56], %138 {strides = array<i32>} : memref<4x8x64xf32, #tpu.memory_space<vmem>>, vector<1x8x64xf32>,
    %c3_i32_57 = arith.constant 3 : i32
    return
  }
  func.func @transform_0(%arg0: i32) -> (i32, i32, i32) {
    %c0_i32 = arith.constant 0 : i32
    %c0_i32_0 = arith.constant 0 : i32
    %c0_i32_1 = arith.constant 0 : i32
    return %c0_i32, %arg0, %c0_i32_0 : i32, i32, i32
  }
  func.func @transform_1(%arg0: i32) -> (i32, i32, i32) {
    %c0_i32 = arith.constant 0 : i32
    %c0_i32_0 = arith.constant 0 : i32
    %c0_i32_1 = arith.constant 0 : i32
    return %c0_i32, %arg0, %c0_i32_0 : i32, i32, i32
  }
  func.func @transform_2(%arg0: i32) -> (i32, i32) {
    %c0_i32 = arith.constant 0 : i32
    %c0_i32_0 = arith.constant 0 : i32
    %c0_i32_1 = arith.constant 0 : i32
    return %c0_i32, %c0_i32_0 : i32, i32
  }
  func.func @transform_3(%arg0: i32) -> (i32, i32) {
    %c0_i32 = arith.constant 0 : i32
    %c0_i32_0 = arith.constant 0 : i32
    %c0_i32_1 = arith.constant 0 : i32
    return %c0_i32, %c0_i32_0 : i32, i32
  }
  func.func @transform_4(%arg0: i32) -> (i32, i32, i32) {
    %c0_i32 = arith.constant 0 : i32
    %c0_i32_0 = arith.constant 0 : i32
    %c0_i32_1 = arith.constant 0 : i32
    return %c0_i32, %arg0, %c0_i32_0 : i32, i32, i32
  }
}

module attributes {stable_mosaic.version = 11 : i64} {
  func.func @_lif_affine_kernel(%arg0: i32, %arg1: memref<4x8x64xf32, #tpu.memory_space<vmem>>, %arg2: memref<1x64xf32, #tpu.memory_space<vmem>>, %arg3: memref<1x64xf32, #tpu.memory_space<vmem>>, %arg4: memref<4x8x64xf32, #tpu.memory_space<vmem>>) attributes {dimension_semantics = [#tpu.dimension_semantics<parallel>], iteration_bounds = array<i64: 2>, scalar_prefetch = 0 : i64, scratch_operands = 0 : i64, tpu.core_type = #tpu.core_type<tc>, window_params = [{transform_indices = @transform_0, window_bounds = array<i64: 4, 8, 64>}, {pipeline_mode = #tpu.pipeline_mode<synchronous>, transform_indices = @transform_1, window_bounds = array<i64: 1, 64>}, {pipeline_mode = #tpu.pipeline_mode<synchronous>, transform_indices = @transform_2, window_bounds = array<i64: 1, 64>}, {transform_indices = @transform_3, window_bounds = array<i64: 4, 8, 64>}]} {
    %c0 = arith.constant 0 : index
    %c0_0 = arith.constant 0 : index
    %0 = vector.load %arg2[%c0, %c0_0] : memref<1x64xf32, #tpu.memory_space<vmem>>, vector<1x64xf32>
    %1 = vector.shape_cast %0 : vector<1x64xf32> to vector<1x64xf32>
    %2 = vector.broadcast %1 : vector<1x64xf32> to vector<8x64xf32>
    %c0_1 = arith.constant 0 : index
    %c0_2 = arith.constant 0 : index
    %3 = vector.load %arg3[%c0_1, %c0_2] : memref<1x64xf32, #tpu.memory_space<vmem>>, vector<1x64xf32>
    %4 = vector.shape_cast %3 : vector<1x64xf32> to vector<1x64xf32>
    %5 = vector.broadcast %4 : vector<1x64xf32> to vector<8x64xf32>
    %c0_3 = arith.constant 0 : index
    %c0_4 = arith.constant 0 : index
    %c0_5 = arith.constant 0 : index
    %6 = vector.load %arg1[%c0_3, %c0_4, %c0_5] : memref<4x8x64xf32, #tpu.memory_space<vmem>>, vector<1x8x64xf32>
    %7 = vector.shape_cast %6 : vector<1x8x64xf32> to vector<8x64xf32>
    %8 = arith.mulf %7, %2 : vector<8x64xf32>
    %9 = arith.addf %8, %5 : vector<8x64xf32>
    %cst = arith.constant 5.000000e-01 : f32
    %10 = vector.broadcast %cst : f32 to vector<8x64xf32>
    %11 = arith.cmpf ogt, %9, %10 : vector<8x64xf32>
    %12 = arith.extui %11 : vector<8x64xi1> to vector<8x64xi32>
    %13 = arith.sitofp %12 : vector<8x64xi32> to vector<8x64xf32>
    %cst_6 = arith.constant 0.000000e+00 : f32
    %cst_7 = arith.constant 1.000000e+00 : f32
    %14 = vector.broadcast %cst_6 : f32 to vector<8x64xf32>
    %15 = arith.maximumf %14, %9 : vector<8x64xf32>
    %16 = vector.broadcast %cst_7 : f32 to vector<8x64xf32>
    %17 = arith.minimumf %16, %15 : vector<8x64xf32>
    %c0_8 = arith.constant 0 : index
    %c0_9 = arith.constant 0 : index
    %c0_10 = arith.constant 0 : index
    %18 = vector.load %arg4[%c0_8, %c0_9, %c0_10] : memref<4x8x64xf32, #tpu.memory_space<vmem>>, vector<1x8x64xf32>
    %19 = vector.shape_cast %18 : vector<1x8x64xf32> to vector<8x64xf32>
    %20 = vector.shape_cast %17 : vector<8x64xf32> to vector<1x8x64xf32>
    tpu.vector_store %arg4[%c0_8, %c0_9, %c0_10], %20 {strides = array<i32>} : memref<4x8x64xf32, #tpu.memory_space<vmem>>, vector<1x8x64xf32>,
    %c1_i32 = arith.constant 1 : i32
    %cst_11 = arith.constant 0.622459352 : f32
    %21 = vector.broadcast %cst_11 : f32 to vector<8x64xf32>
    %22 = arith.mulf %9, %21 : vector<8x64xf32>
    %cst_12 = arith.constant 1.000000e+00 : f32
    %23 = vector.broadcast %cst_12 : f32 to vector<8x64xf32>
    %24 = arith.subf %23, %13 : vector<8x64xf32>
    %25 = arith.mulf %22, %24 : vector<8x64xf32>
    %26 = arith.index_cast %c1_i32 : i32 to index
    %c0_13 = arith.constant 0 : index
    %c0_14 = arith.constant 0 : index
    %27 = vector.load %arg1[%26, %c0_13, %c0_14] : memref<4x8x64xf32, #tpu.memory_space<vmem>>, vector<1x8x64xf32>
    %28 = vector.shape_cast %27 : vector<1x8x64xf32> to vector<8x64xf32>
    %29 = arith.mulf %28, %2 : vector<8x64xf32>
    %30 = arith.addf %29, %5 : vector<8x64xf32>
    %31 = arith.addf %25, %30 : vector<8x64xf32>
    %cst_15 = arith.constant 5.000000e-01 : f32
    %32 = vector.broadcast %cst_15 : f32 to vector<8x64xf32>
    %33 = arith.cmpf ogt, %31, %32 : vector<8x64xf32>
    %34 = arith.extui %33 : vector<8x64xi1> to vector<8x64xi32>
    %35 = arith.sitofp %34 : vector<8x64xi32> to vector<8x64xf32>
    %cst_16 = arith.constant 0.000000e+00 : f32
    %cst_17 = arith.constant 1.000000e+00 : f32
    %36 = vector.broadcast %cst_16 : f32 to vector<8x64xf32>
    %37 = arith.maximumf %36, %31 : vector<8x64xf32>
    %38 = vector.broadcast %cst_17 : f32 to vector<8x64xf32>
    %39 = arith.minimumf %38, %37 : vector<8x64xf32>
    %40 = arith.index_cast %c1_i32 : i32 to index
    %c0_18 = arith.constant 0 : index
    %c0_19 = arith.constant 0 : index
    %41 = vector.load %arg4[%40, %c0_18, %c0_19] : memref<4x8x64xf32, #tpu.memory_space<vmem>>, vector<1x8x64xf32>
    %42 = vector.shape_cast %41 : vector<1x8x64xf32> to vector<8x64xf32>
    %43 = vector.shape_cast %39 : vector<8x64xf32> to vector<1x8x64xf32>
    tpu.vector_store %arg4[%40, %c0_18, %c0_19], %43 {strides = array<i32>} : memref<4x8x64xf32, #tpu.memory_space<vmem>>, vector<1x8x64xf32>,
    %c2_i32 = arith.constant 2 : i32
    %cst_20 = arith.constant 0.622459352 : f32
    %44 = vector.broadcast %cst_20 : f32 to vector<8x64xf32>
    %45 = arith.mulf %31, %44 : vector<8x64xf32>
    %cst_21 = arith.constant 1.000000e+00 : f32
    %46 = vector.broadcast %cst_21 : f32 to vector<8x64xf32>
    %47 = arith.subf %46, %35 : vector<8x64xf32>
    %48 = arith.mulf %45, %47 : vector<8x64xf32>
    %49 = arith.index_cast %c2_i32 : i32 to index
    %c0_22 = arith.constant 0 : index
    %c0_23 = arith.constant 0 : index
    %50 = vector.load %arg1[%49, %c0_22, %c0_23] : memref<4x8x64xf32, #tpu.memory_space<vmem>>, vector<1x8x64xf32>
    %51 = vector.shape_cast %50 : vector<1x8x64xf32> to vector<8x64xf32>
    %52 = arith.mulf %51, %2 : vector<8x64xf32>
    %53 = arith.addf %52, %5 : vector<8x64xf32>
    %54 = arith.addf %48, %53 : vector<8x64xf32>
    %cst_24 = arith.constant 5.000000e-01 : f32
    %55 = vector.broadcast %cst_24 : f32 to vector<8x64xf32>
    %56 = arith.cmpf ogt, %54, %55 : vector<8x64xf32>
    %57 = arith.extui %56 : vector<8x64xi1> to vector<8x64xi32>
    %58 = arith.sitofp %57 : vector<8x64xi32> to vector<8x64xf32>
    %cst_25 = arith.constant 0.000000e+00 : f32
    %cst_26 = arith.constant 1.000000e+00 : f32
    %59 = vector.broadcast %cst_25 : f32 to vector<8x64xf32>
    %60 = arith.maximumf %59, %54 : vector<8x64xf32>
    %61 = vector.broadcast %cst_26 : f32 to vector<8x64xf32>
    %62 = arith.minimumf %61, %60 : vector<8x64xf32>
    %63 = arith.index_cast %c2_i32 : i32 to index
    %c0_27 = arith.constant 0 : index
    %c0_28 = arith.constant 0 : index
    %64 = vector.load %arg4[%63, %c0_27, %c0_28] : memref<4x8x64xf32, #tpu.memory_space<vmem>>, vector<1x8x64xf32>
    %65 = vector.shape_cast %64 : vector<1x8x64xf32> to vector<8x64xf32>
    %66 = vector.shape_cast %62 : vector<8x64xf32> to vector<1x8x64xf32>
    tpu.vector_store %arg4[%63, %c0_27, %c0_28], %66 {strides = array<i32>} : memref<4x8x64xf32, #tpu.memory_space<vmem>>, vector<1x8x64xf32>,
    %c3_i32 = arith.constant 3 : i32
    %cst_29 = arith.constant 0.622459352 : f32
    %67 = vector.broadcast %cst_29 : f32 to vector<8x64xf32>
    %68 = arith.mulf %54, %67 : vector<8x64xf32>
    %cst_30 = arith.constant 1.000000e+00 : f32
    %69 = vector.broadcast %cst_30 : f32 to vector<8x64xf32>
    %70 = arith.subf %69, %58 : vector<8x64xf32>
    %71 = arith.mulf %68, %70 : vector<8x64xf32>
    %72 = arith.index_cast %c3_i32 : i32 to index
    %c0_31 = arith.constant 0 : index
    %c0_32 = arith.constant 0 : index
    %73 = vector.load %arg1[%72, %c0_31, %c0_32] : memref<4x8x64xf32, #tpu.memory_space<vmem>>, vector<1x8x64xf32>
    %74 = vector.shape_cast %73 : vector<1x8x64xf32> to vector<8x64xf32>
    %75 = arith.mulf %74, %2 : vector<8x64xf32>
    %76 = arith.addf %75, %5 : vector<8x64xf32>
    %77 = arith.addf %71, %76 : vector<8x64xf32>
    %cst_33 = arith.constant 5.000000e-01 : f32
    %78 = vector.broadcast %cst_33 : f32 to vector<8x64xf32>
    %79 = arith.cmpf ogt, %77, %78 : vector<8x64xf32>
    %80 = arith.extui %79 : vector<8x64xi1> to vector<8x64xi32>
    %81 = arith.sitofp %80 : vector<8x64xi32> to vector<8x64xf32>
    %cst_34 = arith.constant 0.000000e+00 : f32
    %cst_35 = arith.constant 1.000000e+00 : f32
    %82 = vector.broadcast %cst_34 : f32 to vector<8x64xf32>
    %83 = arith.maximumf %82, %77 : vector<8x64xf32>
    %84 = vector.broadcast %cst_35 : f32 to vector<8x64xf32>
    %85 = arith.minimumf %84, %83 : vector<8x64xf32>
    %86 = arith.index_cast %c3_i32 : i32 to index
    %c0_36 = arith.constant 0 : index
    %c0_37 = arith.constant 0 : index
    %87 = vector.load %arg4[%86, %c0_36, %c0_37] : memref<4x8x64xf32, #tpu.memory_space<vmem>>, vector<1x8x64xf32>
    %88 = vector.shape_cast %87 : vector<1x8x64xf32> to vector<8x64xf32>
    %89 = vector.shape_cast %85 : vector<8x64xf32> to vector<1x8x64xf32>
    tpu.vector_store %arg4[%86, %c0_36, %c0_37], %89 {strides = array<i32>} : memref<4x8x64xf32, #tpu.memory_space<vmem>>, vector<1x8x64xf32>,
    %c3_i32_38 = arith.constant 3 : i32
    return
  }
  func.func @transform_0(%arg0: i32) -> (i32, i32, i32) {
    %c0_i32 = arith.constant 0 : i32
    %c0_i32_0 = arith.constant 0 : i32
    %c0_i32_1 = arith.constant 0 : i32
    return %c0_i32, %arg0, %c0_i32_0 : i32, i32, i32
  }
  func.func @transform_1(%arg0: i32) -> (i32, i32) {
    %c0_i32 = arith.constant 0 : i32
    %c0_i32_0 = arith.constant 0 : i32
    %c0_i32_1 = arith.constant 0 : i32
    return %c0_i32, %c0_i32_0 : i32, i32
  }
  func.func @transform_2(%arg0: i32) -> (i32, i32) {
    %c0_i32 = arith.constant 0 : i32
    %c0_i32_0 = arith.constant 0 : i32
    %c0_i32_1 = arith.constant 0 : i32
    return %c0_i32, %c0_i32_0 : i32, i32
  }
  func.func @transform_3(%arg0: i32) -> (i32, i32, i32) {
    %c0_i32 = arith.constant 0 : i32
    %c0_i32_0 = arith.constant 0 : i32
    %c0_i32_1 = arith.constant 0 : i32
    return %c0_i32, %arg0, %c0_i32_0 : i32, i32, i32
  }
}

</mosaic_0001>

<llo_original>
// kernel: tile.34
$region0: #{tile.34}
  %s0 = inlined_call_operand.vmem [shape: f32[8,8], index: 0, kind: input, shape index: {}]
  %s1 = inlined_call_operand.vmem [shape: f32[1,64], index: 1, kind: output, shape index: {}]
  $region1: #{tile.34} parent=0
    #allocation0 [shape = 'u8[4096]{0}', space=vmem, size = 0x1000, scoped, tag = 'scoped mem for output reshape']
    %v2 = vld [vmem:[%s0] sm:$0x1]
    %vm3 = vcmask 64512
    %4 = vst.msk [vmem:[#allocation0] sm:$0x1] %vm3, %v2
    %s5 = scalar_lea.vmem %s0, 7
    %v6 = vld [vmem:[%s5] sm:$0x1]
    %7 = vrot.lane.b32.xlu0 %v6, 56
    %v8 = vpop.permute.xlu0 %7
    %vm9 = vcmask 523712
    %10 = vst.msk [vmem:[#allocation0] sm:$0x1] %vm9, %v8
    %s11 = scalar_lea.vmem %s0, 6
    %v12 = vld [vmem:[%s11] sm:$0x1]
    %13 = vrot.lane.b32.xlu0 %v12, 48
    %v14 = vpop.permute.xlu0 %13
    %vm15 = vcmask 458112
    %16 = vst.msk [vmem:[#allocation0] sm:$0x1] %vm15, %v14
    %s17 = scalar_lea.vmem %s0, 5
    %v18 = vld [vmem:[%s17] sm:$0x1]
    %19 = vrot.lane.b32.xlu0 %v18, 40
    %v20 = vpop.permute.xlu0 %19
    %vm21 = vcmask 392512
    %22 = vst.msk [vmem:[#allocation0] sm:$0x1] %vm21, %v20
    %s23 = scalar_lea.vmem %s0, 4
    %v24 = vld [vmem:[%s23] sm:$0x1]
    %25 = vrot.lane.b32.xlu0 %v24, 32
    %v26 = vpop.permute.xlu0 %25
    %vm27 = vcmask 326912
    %28 = vst.msk [vmem:[#allocation0] sm:$0x1] %vm27, %v26
    %s29 = scalar_lea.vmem %s0, 3
    %v30 = vld [vmem:[%s29] sm:$0x1]
    %31 = vrot.lane.b32.xlu0 %v30, 24
    %v32 = vpop.permute.xlu0 %31
    %vm33 = vcmask 261312
    %34 = vst.msk [vmem:[#allocation0] sm:$0x1] %vm33, %v32
    %s35 = scalar_lea.vmem %s0, 2
    %v36 = vld [vmem:[%s35] sm:$0x1]
    %37 = vrot.lane.b32.xlu0 %v36, 16
    %v38 = vpop.permute.xlu0 %37
    %vm39 = vcmask 195712
    %40 = vst.msk [vmem:[#allocation0] sm:$0x1] %vm39, %v38
    %s41 = scalar_lea.vmem %s0, 1
    %v42 = vld [vmem:[%s41] sm:$0x1]
    %43 = vrot.lane.b32.xlu0 %v42, 8
    %v44 = vpop.permute.xlu0 %43
    %vm45 = vcmask 130112
    %46 = vst.msk [vmem:[#allocation0] sm:$0x1] %vm45, %v44
    %s48 = ssub.s32 2, 1
    %v49 = vld [vmem:[#allocation0] sm:%s48]
    %s51 = ssub.s32 2, 1
    %52 = vst [vmem:[%s1] sm:%s51] %v49

// kernel: tile.33
$region0: #{tile.33}
  #allocation0 [shape = 's32[1]{0}', space=sflag, size = 0x4, scoped, tag = 'scoped memory for tile.33']
  %s0 = inlined_call_operand.vmem [shape: f32[8], index: 0, kind: input, shape index: {}]
  %s1 = inlined_call_operand.vmem [shape: f32[8,8], index: 1, kind: output, shape index: {}]
  // Predicated region
  $region2: #{tile.33} parent=0 // pred_check
    _
  $region3: #{tile.33} parent=0 // pred_check_branch
    %3 = sbr.rel (0) target = $region5
  $region4: #{tile.33} parent=0 // pred_region
    _
  $region5: #{tile.33} parent=0 // pred_fallthru
    _
  %v4 = vld [vmem:[%s0] ss:$0 sm:$0xff]
  %5 = vst [vmem:[%s1] sm:$0xff] %v4

// kernel: liaf_resblock_forward.7
$region0: #{liaf_resblock_forward.7}
  #allocation0 [shape = 'u32[]', space=smem, size = 0x4, offset = 0x4, fixed_abs, tag = 'smem constant byte address 0x4 - core index']
  #allocation1 [shape = 'u32[72,128]{1,0:T(1,128)}', space=vmem, size = 0x9000, scoped, tag = 'internal scratch']
  %s0 = inlined_call_operand.vmem [shape: f32[4,16,64], index: 0, kind: input, shape index: {}]
  %s1 = inlined_call_operand.vmem [shape: f32[4,16,64], index: 1, kind: input, shape index: {}]
  %s2 = inlined_call_operand.vmem [shape: f32[1,64], index: 2, kind: input, shape index: {}]
  %s3 = inlined_call_operand.vmem [shape: f32[1,64], index: 3, kind: input, shape index: {}]
  %s4 = inlined_call_operand.vmem [shape: f32[4,16,64], index: 4, kind: output, shape index: {}]
  %s5 = sld [smem:[#allocation0]]
  $region159: #{liaf_resblock_forward.7} parent=0
    _
  %s7 = ssub.s32 1, %s5
  %s8 = scalar_select 0, %s7, %s5
  $region1: #{liaf_resblock_forward.7} parent=0
    #allocation2 [shape = 'u8[32768]{0}', space=vmem, size = 0x8000, scoped, tag = 'input window, operand 0']
    #allocation3 [shape = 'u8[32768]{0}', space=vmem, size = 0x8000, scoped, tag = 'input window, operand 1']
    #allocation4 [shape = 'u8[32768]{0}', space=vmem, size = 0x8000, scoped, tag = 'output window, operand 0']
    loop: start=0, step=1, limit=4
    $region2: #{liaf_resblock_forward.7} parent=1 // loop_pre_header
      _
    $region3: #{liaf_resblock_forward.7} parent=1 // loop_header
      %s10 = sphi 0, %s14
      %p11 = scmp.ge.s32.totalorder %s10, 4
      %s20 = sphi 0, %s22
      %s23 = sphi 0, %s20
      %s24 = sphi 0, %s23
      %s40 = sphi 0, %s24
      %s46 = sphi 0, %s48
      %s49 = sphi 0, %s46
      %s50 = sphi 0, %s49
      %s66 = sphi 0, %s50
      %s70 = sphi 0, %s70
      %s72 = sphi 0, %s70
      %s73 = sphi 0, %s72
      %s87 = sphi 0, %s73
      %s91 = sphi 0, %s91
      %s93 = sphi 0, %s91
      %s94 = sphi 0, %s93
      %s108 = sphi 0, %s94
      %s114 = sphi 0, %s116
      %s117 = sphi 0, %s114
      %s118 = sphi 0, %s117
      %s134 = sphi 0, %s118
    $region4: #{liaf_resblock_forward.7} parent=1 // loop_header_branch
      %13 = sbr.rel (%p11) target = $region8
    $region5: #{liaf_resblock_forward.7} parent=1 // loop_body
      %s15 = ssub.s32 %s10, 1
      %s16 = ssub.s32 %s10, 2
      %s17 = sadd.s32 %s10, 1
      %s18 = ssub.s32 %s10, %s17
      %p19 = scmp.eq.s32.totalorder %s18, 0
      %s21 = sadd.s32 %s20, 1
      %s22 = scalar_select %p19, %s20, %s21
      %p25 = pneg %p19
      %p26 = scmp.eq.s32.totalorder %s10, 1
      %p27 = por %p25, %p26
      %p28 = scmp.ne.s32.totalorder %s20, %s23
      %p29 = scmp.eq.s32.totalorder %s10, 0
      %p30 = por %p28, %p29
      %p31 = scmp.ne.s32.totalorder %s20, %s23
      %p32 = scmp.eq.s32.totalorder %s15, 1
      %p33 = por %p31, %p32
      %p34 = scmp.ne.s32.totalorder %s23, %s24
      %p35 = scmp.eq.s32.totalorder %s15, 0
      %p36 = por %p34, %p35
      %p37 = scmp.ne.s32.totalorder %s23, %s24
      %p38 = scmp.eq.s32.totalorder %s16, 1
      %p39 = por %p37, %p38
      %p41 = scmp.ne.s32.totalorder %s24, %s40
      %p42 = scmp.eq.s32.totalorder %s16, 0
      %p43 = por %p41, %p42
      %s44 = ssub.s32 %s10, %s17
      %p45 = scmp.eq.s32.totalorder %s44, 0
      %s47 = sadd.s32 %s46, 1
      %s48 = scalar_select %p45, %s46, %s47
      %p51 = pneg %p45
      %p52 = scmp.eq.s32.totalorder %s10, 1
      %p53 = por %p51, %p52
      %p54 = scmp.ne.s32.totalorder %s46, %s49
      %p55 = scmp.eq.s32.totalorder %s10, 0
      %p56 = por %p54, %p55
      %p57 = scmp.ne.s32.totalorder %s46, %s49
      %p58 = scmp.eq.s32.totalorder %s15, 1
      %p59 = por %p57, %p58
      %p60 = scmp.ne.s32.totalorder %s49, %s50
      %p61 = scmp.eq.s32.totalorder %s15, 0
      %p62 = por %p60, %p61
      %p63 = scmp.ne.s32.totalorder %s49, %s50
      %p64 = scmp.eq.s32.totalorder %s16, 1
      %p65 = por %p63, %p64
      %p67 = scmp.ne.s32.totalorder %s50, %s66
      %p68 = scmp.eq.s32.totalorder %s16, 0
      %p69 = por %p67, %p68
      %s71 = sadd.s32 %s70, 1
      %p74 = scmp.eq.s32.totalorder %s10, 1
      %p75 = scmp.ne.s32.totalorder %s70, %s72
      %p76 = scmp.eq.s32.totalorder %s10, 0
      %p77 = por %p75, %p76
      %p78 = scmp.ne.s32.totalorder %s70, %s72
      %p79 = scmp.eq.s32.totalorder %s15, 1
      %p80 = por %p78, %p79
      %p81 = scmp.ne.s32.totalorder %s72, %s73
      %p82 = scmp.eq.s32.totalorder %s15, 0
      %p83 = por %p81, %p82
      %p84 = scmp.ne.s32.totalorder %s72, %s73
      %p85 = scmp.eq.s32.totalorder %s16, 1
      %p86 = por %p84, %p85
      %p88 = scmp.ne.s32.totalorder %s73, %s87
      %p89 = scmp.eq.s32.totalorder %s16, 0
      %p90 = por %p88, %p89
      %s92 = sadd.s32 %s91, 1
      %p95 = scmp.eq.s32.totalorder %s10, 1
      %p96 = scmp.ne.s32.totalorder %s91, %s93
      %p97 = scmp.eq.s32.totalorder %s10, 0
      %p98 = por %p96, %p97
      %p99 = scmp.ne.s32.totalorder %s91, %s93
      %p100 = scmp.eq.s32.totalorder %s15, 1
      %p101 = por %p99, %p100
      %p102 = scmp.ne.s32.totalorder %s93, %s94
      %p103 = scmp.eq.s32.totalorder %s15, 0
      %p104 = por %p102, %p103
      %p105 = scmp.ne.s32.totalorder %s93, %s94
      %p106 = scmp.eq.s32.totalorder %s16, 1
      %p107 = por %p105, %p106
      %p109 = scmp.ne.s32.totalorder %s94, %s108
      %p110 = scmp.eq.s32.totalorder %s16, 0
      %p111 = por %p109, %p110
      %s112 = ssub.s32 %s10, %s17
      %p113 = scmp.eq.s32.totalorder %s112, 0
      %s115 = sadd.s32 %s114, 1
      %s116 = scalar_select %p113, %s114, %s115
      %p119 = pneg %p113
      %p120 = scmp.eq.s32.totalorder %s10, 1
      %p121 = por %p119, %p120
      %p122 = scmp.ne.s32.totalorder %s114, %s117
      %p123 = scmp.eq.s32.totalorder %s10, 0
      %p124 = por %p122, %p123
      %p125 = scmp.ne.s32.totalorder %s114, %s117
      %p126 = scmp.eq.s32.totalorder %s15, 1
      %p127 = por %p125, %p126
      %p128 = scmp.ne.s32.totalorder %s117, %s118
      %p129 = scmp.eq.s32.totalorder %s15, 0
      %p130 = por %p128, %p129
      %p131 = scmp.ne.s32.totalorder %s117, %s118
      %p132 = scmp.eq.s32.totalorder %s16, 1
      %p133 = por %p131, %p132
      %p135 = scmp.ne.s32.totalorder %s118, %s134
      %p136 = scmp.eq.s32.totalorder %s16, 0
      %p137 = por %p135, %p136
      %p138 = scmp.le.s32.totalorder 1, %s10
      %p139 = scmp.lt.s32.totalorder %s10, 3
      %p140 = pnand %p138, %p139
      %p141 = pneg %p140
      // Predicated region
      $region9: #{liaf_resblock_forward.7} parent=5 // pred_check
        _
      $region10: #{liaf_resblock_forward.7} parent=5 // pred_check_branch
        %143 = sbr.rel (%p140) target = $region12
      $region11: #{liaf_resblock_forward.7} parent=5 // pred_region
        %s144 = ssub.s32 %s10, 1
        // Predicated region
        $region13: #{liaf_resblock_forward.7} parent=11 // pred_check
          %p145 = pneg %p83
        $region14: #{liaf_resblock_forward.7} parent=11 // pred_check_branch
          %147 = sbr.rel (%p145) target = $region16
        $region15: #{liaf_resblock_forward.7} parent=11 // pred_region
          _
        $region16: #{liaf_resblock_forward.7} parent=11 // pred_fallthru
          _
        // Predicated region
        $region17: #{liaf_resblock_forward.7} parent=11 // pred_check
          %p148 = pneg %p104
        $region18: #{liaf_resblock_forward.7} parent=11 // pred_check_branch
          %150 = sbr.rel (%p148) target = $region20
        $region19: #{liaf_resblock_forward.7} parent=11 // pred_region
          _
        $region20: #{liaf_resblock_forward.7} parent=11 // pred_fallthru
          _
      $region12: #{liaf_resblock_forward.7} parent=5 // pred_fallthru
        _
      %p151 = scmp.lt.s32.totalorder %s10, 2
      // Predicated region
      $region21: #{liaf_resblock_forward.7} parent=5 // pred_check
        %p152 = pneg %p151
      $region22: #{liaf_resblock_forward.7} parent=5 // pred_check_branch
        %154 = sbr.rel (%p152) target = $region24
      $region23: #{liaf_resblock_forward.7} parent=5 // pred_region
        // Predicated region
        $region25: #{liaf_resblock_forward.7} parent=23 // pred_check
          %p155 = pneg %p30
        $region26: #{liaf_resblock_forward.7} parent=23 // pred_check_branch
          %157 = sbr.rel (%p155) target = $region28
        $region27: #{liaf_resblock_forward.7} parent=23 // pred_region
          %s158 = sand.u32 %s20, 1
          %s159 = sand.u32 %s20, 1
          %s160 = smul.addr %s159, 32
          %s161 = scalar_lea.vmem [#allocation2], %s160
          %s162 = smul.addr %s10, 8
          %s163 = scalar_lea.vmem %s0, %s162
          // Predicated region
          $region29: #{liaf_resblock_forward.7} parent=27 // pred_check
            _
          $region30: #{liaf_resblock_forward.7} parent=27 // pred_check_branch
            %165 = sbr.rel (0) target = $region32
          $region31: #{liaf_resblock_forward.7} parent=27 // pred_region
            // Predicated region
            $region33: #{liaf_resblock_forward.7} parent=31 // pred_check
              _
            $region34: #{liaf_resblock_forward.7} parent=31 // pred_check_branch
              %167 = sbr.rel (0) target = $region36
            $region35: #{liaf_resblock_forward.7} parent=31 // pred_region
              // Predicated region
              $region48: #{liaf_resblock_forward.7} parent=35 // pred_check
                _
              $region49: #{liaf_resblock_forward.7} parent=35 // pred_check_branch
                %189 = sbr.rel (0) target = $region51
              $region50: #{liaf_resblock_forward.7} parent=35 // pred_region
                loop: start=0, step=1, limit=1
                $region52: #{liaf_resblock_forward.7} parent=50 // loop_pre_header
                  _
                $region53: #{liaf_resblock_forward.7} parent=50 // loop_header
                  %s191 = sphi 0, %s195
                  %p192 = scmp.ge.s32.totalorder %s191, 1
                  %s196 = sphi %s163, %s163
                  %s197 = sphi %s161, %s161
                $region54: #{liaf_resblock_forward.7} parent=50 // loop_header_branch
                  %194 = sbr.rel (%p192) target = $region58
                $region55: #{liaf_resblock_forward.7} parent=50 // loop_body
                  %v198 = vld [vmem:[%s196] sm:$0xff]
                  %199 = vst [vmem:[%s197] sm:$0xff] %v198
                  %v200 = vld [vmem:[%s196 + $0x10] sm:$0xff]
                  %201 = vst [vmem:[%s197 + $0x8] sm:$0xff] %v200
                  %v202 = vld [vmem:[%s196 + $0x20] sm:$0xff]
                  %203 = vst [vmem:[%s197 + $0x10] sm:$0xff] %v202
                  %v204 = vld [vmem:[%s196 + $0x30] sm:$0xff]
                  %205 = vst [vmem:[%s197 + $0x18] sm:$0xff] %v204
                $region56: #{liaf_resblock_forward.7} parent=50 // loop_footer
                  %s195 = sadd.s32 1, %s191
                $region57: #{liaf_resblock_forward.7} parent=50 // loop_footer_branch
                  %190 = sbr.rel target = $region53
                $region58: #{liaf_resblock_forward.7} parent=50 // loop_exit
                  _
              $region51: #{liaf_resblock_forward.7} parent=35 // pred_fallthru
                _
              // Predicated region
              $region59: #{liaf_resblock_forward.7} parent=35 // pred_check
                _
              $region60: #{liaf_resblock_forward.7} parent=35 // pred_check_branch
                %207 = sbr.rel target = $region62
              $region61: #{liaf_resblock_forward.7} parent=35 // pred_region
                _
              $region62: #{liaf_resblock_forward.7} parent=35 // pred_fallthru
                _
            $region36: #{liaf_resblock_forward.7} parent=31 // pred_fallthru
              _
            // Predicated region
            $region37: #{liaf_resblock_forward.7} parent=31 // pred_check
              _
            $region38: #{liaf_resblock_forward.7} parent=31 // pred_check_branch
              %169 = sbr.rel target = $region40
            $region39: #{liaf_resblock_forward.7} parent=31 // pred_region
              %s171 = ssub.s32 256, 1
              loop: start=0, step=1, limit=1
              $region41: #{liaf_resblock_forward.7} parent=39 // loop_pre_header
                _
              $region42: #{liaf_resblock_forward.7} parent=39 // loop_header
                %s173 = sphi 0, %s177
                %p174 = scmp.ge.s32.totalorder %s173, 1
                %s178 = sphi %s163, %s163
                %s179 = sphi %s161, %s161
              $region43: #{liaf_resblock_forward.7} parent=39 // loop_header_branch
                %176 = sbr.rel (%p174) target = $region47
              $region44: #{liaf_resblock_forward.7} parent=39 // loop_body
                %v180 = vld [vmem:[%s178] sm:%s171]
                %181 = vst [vmem:[%s179] sm:%s171] %v180
                %v182 = vld [vmem:[%s178 + $0x10] sm:%s171]
                %183 = vst [vmem:[%s179 + $0x8] sm:%s171] %v182
                %v184 = vld [vmem:[%s178 + $0x20] sm:%s171]
                %185 = vst [vmem:[%s179 + $0x10] sm:%s171] %v184
                %v186 = vld [vmem:[%s178 + $0x30] sm:%s171]
                %187 = vst [vmem:[%s179 + $0x18] sm:%s171] %v186
              $region45: #{liaf_resblock_forward.7} parent=39 // loop_footer
                %s177 = sadd.s32 1, %s173
              $region46: #{liaf_resblock_forward.7} parent=39 // loop_footer_branch
                %172 = sbr.rel target = $region42
              $region47: #{liaf_resblock_forward.7} parent=39 // loop_exit
                _
            $region40: #{liaf_resblock_forward.7} parent=31 // pred_fallthru
              _
          $region32: #{liaf_resblock_forward.7} parent=27 // pred_fallthru
            _
          %208 = vnop
        $region28: #{liaf_resblock_forward.7} parent=23 // pred_fallthru
          _
        // Predicated region
        $region63: #{liaf_resblock_forward.7} parent=23 // pred_check
          %p209 = pneg %p56
        $region64: #{liaf_resblock_forward.7} parent=23 // pred_check_branch
          %211 = sbr.rel (%p209) target = $region66
        $region65: #{liaf_resblock_forward.7} parent=23 // pred_region
          %s212 = sand.u32 %s46, 1
          %s213 = sand.u32 %s46, 1
          %s214 = smul.addr %s213, 32
          %s215 = scalar_lea.vmem [#allocation3], %s214
          %s216 = smul.addr %s10, 8
          %s217 = scalar_lea.vmem %s1, %s216
          // Predicated region
          $region67: #{liaf_resblock_forward.7} parent=65 // pred_check
            _
          $region68: #{liaf_resblock_forward.7} parent=65 // pred_check_branch
            %219 = sbr.rel (0) target = $region70
          $region69: #{liaf_resblock_forward.7} parent=65 // pred_region
            // Predicated region
            $region71: #{liaf_resblock_forward.7} parent=69 // pred_check
              _
            $region72: #{liaf_resblock_forward.7} parent=69 // pred_check_branch
              %221 = sbr.rel (0) target = $region74
            $region73: #{liaf_resblock_forward.7} parent=69 // pred_region
              // Predicated region
              $region86: #{liaf_resblock_forward.7} parent=73 // pred_check
                _
              $region87: #{liaf_resblock_forward.7} parent=73 // pred_check_branch
                %243 = sbr.rel (0) target = $region89
              $region88: #{liaf_resblock_forward.7} parent=73 // pred_region
                loop: start=0, step=1, limit=1
                $region90: #{liaf_resblock_forward.7} parent=88 // loop_pre_header
                  _
                $region91: #{liaf_resblock_forward.7} parent=88 // loop_header
                  %s245 = sphi 0, %s249
                  %p246 = scmp.ge.s32.totalorder %s245, 1
                  %s250 = sphi %s217, %s217
                  %s251 = sphi %s215, %s215
                $region92: #{liaf_resblock_forward.7} parent=88 // loop_header_branch
                  %248 = sbr.rel (%p246) target = $region96
                $region93: #{liaf_resblock_forward.7} parent=88 // loop_body
                  %v252 = vld [vmem:[%s250] sm:$0xff]
                  %253 = vst [vmem:[%s251] sm:$0xff] %v252
                  %v254 = vld [vmem:[%s250 + $0x10] sm:$0xff]
                  %255 = vst [vmem:[%s251 + $0x8] sm:$0xff] %v254
                  %v256 = vld [vmem:[%s250 + $0x20] sm:$0xff]
                  %257 = vst [vmem:[%s251 + $0x10] sm:$0xff] %v256
                  %v258 = vld [vmem:[%s250 + $0x30] sm:$0xff]
                  %259 = vst [vmem:[%s251 + $0x18] sm:$0xff] %v258
                $region94: #{liaf_resblock_forward.7} parent=88 // loop_footer
                  %s249 = sadd.s32 1, %s245
                $region95: #{liaf_resblock_forward.7} parent=88 // loop_footer_branch
                  %244 = sbr.rel target = $region91
                $region96: #{liaf_resblock_forward.7} parent=88 // loop_exit
                  _
              $region89: #{liaf_resblock_forward.7} parent=73 // pred_fallthru
                _
              // Predicated region
              $region97: #{liaf_resblock_forward.7} parent=73 // pred_check
                _
              $region98: #{liaf_resblock_forward.7} parent=73 // pred_check_branch
                %261 = sbr.rel target = $region100
              $region99: #{liaf_resblock_forward.7} parent=73 // pred_region
                _
              $region100: #{liaf_resblock_forward.7} parent=73 // pred_fallthru
                _
            $region74: #{liaf_resblock_forward.7} parent=69 // pred_fallthru
              _
            // Predicated region
            $region75: #{liaf_resblock_forward.7} parent=69 // pred_check
              _
            $region76: #{liaf_resblock_forward.7} parent=69 // pred_check_branch
              %223 = sbr.rel target = $region78
            $region77: #{liaf_resblock_forward.7} parent=69 // pred_region
              %s225 = ssub.s32 256, 1
              loop: start=0, step=1, limit=1
              $region79: #{liaf_resblock_forward.7} parent=77 // loop_pre_header
                _
              $region80: #{liaf_resblock_forward.7} parent=77 // loop_header
                %s227 = sphi 0, %s231
                %p228 = scmp.ge.s32.totalorder %s227, 1
                %s232 = sphi %s217, %s217
                %s233 = sphi %s215, %s215
              $region81: #{liaf_resblock_forward.7} parent=77 // loop_header_branch
                %230 = sbr.rel (%p228) target = $region85
              $region82: #{liaf_resblock_forward.7} parent=77 // loop_body
                %v234 = vld [vmem:[%s232] sm:%s225]
                %235 = vst [vmem:[%s233] sm:%s225] %v234
                %v236 = vld [vmem:[%s232 + $0x10] sm:%s225]
                %237 = vst [vmem:[%s233 + $0x8] sm:%s225] %v236
                %v238 = vld [vmem:[%s232 + $0x20] sm:%s225]
                %239 = vst [vmem:[%s233 + $0x10] sm:%s225] %v238
                %v240 = vld [vmem:[%s232 + $0x30] sm:%s225]
                %241 = vst [vmem:[%s233 + $0x18] sm:%s225] %v240
              $region83: #{liaf_resblock_forward.7} parent=77 // loop_footer
                %s231 = sadd.s32 1, %s227
              $region84: #{liaf_resblock_forward.7} parent=77 // loop_footer_branch
                %226 = sbr.rel target = $region80
              $region85: #{liaf_resblock_forward.7} parent=77 // loop_exit
                _
            $region78: #{liaf_resblock_forward.7} parent=69 // pred_fallthru
              _
          $region70: #{liaf_resblock_forward.7} parent=65 // pred_fallthru
            _
          %262 = vnop
        $region66: #{liaf_resblock_forward.7} parent=23 // pred_fallthru
          _
      $region24: #{liaf_resblock_forward.7} parent=5 // pred_fallthru
        _
      %p263 = scmp.le.s32.totalorder 1, %s10
      %p264 = scmp.lt.s32.totalorder %s10, 3
      %p265 = pnand %p263, %p264
      %p266 = pneg %p265
      // Predicated region
      $region101: #{liaf_resblock_forward.7} parent=5 // pred_check
        _
      $region102: #{liaf_resblock_forward.7} parent=5 // pred_check_branch
        %268 = sbr.rel (%p265) target = $region104
      $region103: #{liaf_resblock_forward.7} parent=5 // pred_region
        %s269 = ssub.s32 %s10, 1
        %s270 = sand.u32 %s23, 1
        %s271 = sand.u32 %s23, 1
        %s272 = smul.addr %s271, 32
        %s273 = scalar_lea.vmem [#allocation2], %s272
        // Predicated region
        $region105: #{liaf_resblock_forward.7} parent=103 // pred_check
          %p274 = pneg %p36
        $region106: #{liaf_resblock_forward.7} parent=103 // pred_check_branch
          %276 = sbr.rel (%p274) target = $region108
        $region107: #{liaf_resblock_forward.7} parent=103 // pred_region
          _
        $region108: #{liaf_resblock_forward.7} parent=103 // pred_fallthru
          _
        %s277 = sand.u32 %s49, 1
        %s278 = sand.u32 %s49, 1
        %s279 = smul.addr %s278, 32
        %s280 = scalar_lea.vmem [#allocation3], %s279
        // Predicated region
        $region109: #{liaf_resblock_forward.7} parent=103 // pred_check
          %p281 = pneg %p62
        $region110: #{liaf_resblock_forward.7} parent=103 // pred_check_branch
          %283 = sbr.rel (%p281) target = $region112
        $region111: #{liaf_resblock_forward.7} parent=103 // pred_region
          _
        $region112: #{liaf_resblock_forward.7} parent=103 // pred_fallthru
          _
        %s284 = sand.u32 %s23, 1
        %s285 = sand.u32 %s23, 1
        %s286 = smul.addr %s285, 32
        %s287 = scalar_lea.vmem [#allocation2], %s286
        %p288 = pneg %p36
        %p289 = pneg %p33
        %s290 = sand.u32 %s49, 1
        %s291 = sand.u32 %s49, 1
        %s292 = smul.addr %s291, 32
        %s293 = scalar_lea.vmem [#allocation3], %s292
        %p294 = pneg %p62
        %p295 = pneg %p59
        %p296 = pneg %p83
        %p297 = pneg %p80
        %p298 = pneg %p104
        %p299 = pneg %p101
        %p300 = pneg %p130
        %p301 = pneg %p127
        %s302 = sand.u32 %s117, 1
        %s303 = sand.u32 %s117, 1
        %s304 = smul.addr %s303, 32
        %s305 = scalar_lea.vmem [#allocation4], %s304
        %v306 = vld [vmem:[%s2] sm:$0x1]
        %v308 = vperm.slane %v306, 0
        %v310 = vld [vmem:[%s3] sm:$0x1]
        %v312 = vperm.slane %v310, 0
        %v314 = vld [vmem:[%s273] sm:$0xff]
        %v315 = vmul.f32 %v314, %v308
        %v316 = vadd.f32 %v315, %v312
        %vm317 = vcmp.gt.f32.partialorder %v316, 0.5
        %v318 = vsel %vm317, 1, 0
        %v319 = vcvt.s32.f32 %v318
        %v320 = vmax.f32 %v316, 0.0
        %v321 = vmin.f32 %v320, 1.0
        %v322 = vld [vmem:[%s280] sm:$0xff]
        %v323 = vadd.f32 %v321, %v322
        %vm324 = vcmp.gt.f32.partialorder %v323, 0.5
        %v325 = vsel %vm324, 1, 0
        %v326 = vcvt.s32.f32 %v325
        %vm327 = vcmask 523264
        %328 = vst.msk [vmem:[%s305] sm:$0xff] %vm327, %v326
        %v329 = vmul.f32 %v316, 0.62245935
        %v330 = vsub.f32 1.0, %v319
        %v331 = vmul.f32 %v329, %v330
        %s332 = scalar_lea.vmem %s273, 8 [#allocation2]
        %v333 = vld [vmem:[%s332] sm:$0xff]
        %v334 = vmul.f32 %v333, %v308
        %v335 = vadd.f32 %v334, %v312
        %v336 = vadd.f32 %v331, %v335
        %vm337 = vcmp.gt.f32.partialorder %v336, 0.5
        %v338 = vsel %vm337, 1, 0
        %v339 = vcvt.s32.f32 %v338
        %v340 = vmax.f32 %v336, 0.0
        %v341 = vmin.f32 %v340, 1.0
        %v342 = vmul.f32 %v323, 0.62245935
        %v343 = vsub.f32 1.0, %v326
        %v344 = vmul.f32 %v342, %v343
        %s345 = scalar_lea.vmem %s280, 8 [#allocation3]
        %v346 = vld [vmem:[%s345] sm:$0xff]
        %v347 = vadd.f32 %v341, %v346
        %v348 = vadd.f32 %v344, %v347
        %vm349 = vcmp.gt.f32.partialorder %v348, 0.5
        %v350 = vsel %vm349, 1, 0
        %v351 = vcvt.s32.f32 %v350
        %s352 = scalar_lea.vmem %s305, 8 [#allocation4]
        %353 = vst.msk [vmem:[%s352] sm:$0xff] %vm327, %v351
        %v354 = vmul.f32 %v336, 0.62245935
        %v355 = vsub.f32 1.0, %v339
        %v356 = vmul.f32 %v354, %v355
        %s357 = scalar_lea.vmem %s273, 16 [#allocation2]
        %v358 = vld [vmem:[%s357] sm:$0xff]
        %v359 = vmul.f32 %v358, %v308
        %v360 = vadd.f32 %v359, %v312
        %v361 = vadd.f32 %v356, %v360
        %vm362 = vcmp.gt.f32.partialorder %v361, 0.5
        %v363 = vsel %vm362, 1, 0
        %v364 = vcvt.s32.f32 %v363
        %v365 = vmax.f32 %v361, 0.0
        %v366 = vmin.f32 %v365, 1.0
        %v367 = vmul.f32 %v348, 0.62245935
        %v368 = vsub.f32 1.0, %v351
        %v369 = vmul.f32 %v367, %v368
        %s370 = scalar_lea.vmem %s280, 16 [#allocation3]
        %v371 = vld [vmem:[%s370] sm:$0xff]
        %v372 = vadd.f32 %v366, %v371
        %v373 = vadd.f32 %v369, %v372
        %vm374 = vcmp.gt.f32.partialorder %v373, 0.5
        %v375 = vsel %vm374, 1, 0
        %v376 = vcvt.s32.f32 %v375
        %s377 = scalar_lea.vmem %s305, 16 [#allocation4]
        %378 = vst.msk [vmem:[%s377] sm:$0xff] %vm327, %v376
        %v379 = vmul.f32 %v361, 0.62245935
        %v380 = vsub.f32 1.0, %v364
        %v381 = vmul.f32 %v379, %v380
        %s382 = scalar_lea.vmem %s273, 24 [#allocation2]
        %v383 = vld [vmem:[%s382] sm:$0xff]
        %v384 = vmul.f32 %v383, %v308
        %v385 = vadd.f32 %v384, %v312
        %v386 = vadd.f32 %v381, %v385
        %v387 = vmax.f32 %v386, 0.0
        %v388 = vmin.f32 %v387, 1.0
        %v389 = vmul.f32 %v373, 0.62245935
        %v390 = vsub.f32 1.0, %v376
        %v391 = vmul.f32 %v389, %v390
        %s392 = scalar_lea.vmem %s280, 24 [#allocation3]
        %v393 = vld [vmem:[%s392] sm:$0xff]
        %v394 = vadd.f32 %v388, %v393
        %v395 = vadd.f32 %v391, %v394
        %vm396 = vcmp.gt.f32.partialorder %v395, 0.5
        %v397 = vsel %vm396, 1, 0
        %v398 = vcvt.s32.f32 %v397
        %s399 = scalar_lea.vmem %s305, 24 [#allocation4]
        %400 = vst.msk [vmem:[%s399] sm:$0xff] %vm327, %v398
        %s401 = sand.u32 %s117, 1
        %s402 = sand.u32 %s117, 1
        %s403 = smul.addr %s402, 32
        %s404 = scalar_lea.vmem [#allocation4], %s403
        // Predicated region
        $region113: #{liaf_resblock_forward.7} parent=103 // pred_check
          %p405 = pneg %p127
        $region114: #{liaf_resblock_forward.7} parent=103 // pred_check_branch
          %407 = sbr.rel (%p405) target = $region116
        $region115: #{liaf_resblock_forward.7} parent=103 // pred_region
          %s408 = smul.addr %s15, 8
          %s409 = scalar_lea.vmem %s4, %s408
          // Predicated region
          $region117: #{liaf_resblock_forward.7} parent=115 // pred_check
            _
          $region118: #{liaf_resblock_forward.7} parent=115 // pred_check_branch
            %411 = sbr.rel (0) target = $region120
          $region119: #{liaf_resblock_forward.7} parent=115 // pred_region
            // Predicated region
            $region121: #{liaf_resblock_forward.7} parent=119 // pred_check
              _
            $region122: #{liaf_resblock_forward.7} parent=119 // pred_check_branch
              %413 = sbr.rel (0) target = $region124
            $region123: #{liaf_resblock_forward.7} parent=119 // pred_region
              // Predicated region
              $region136: #{liaf_resblock_forward.7} parent=123 // pred_check
                _
              $region137: #{liaf_resblock_forward.7} parent=123 // pred_check_branch
                %435 = sbr.rel (0) target = $region139
              $region138: #{liaf_resblock_forward.7} parent=123 // pred_region
                loop: start=0, step=1, limit=1
                $region140: #{liaf_resblock_forward.7} parent=138 // loop_pre_header
                  _
                $region141: #{liaf_resblock_forward.7} parent=138 // loop_header
                  %s437 = sphi 0, %s441
                  %p438 = scmp.ge.s32.totalorder %s437, 1
                  %s442 = sphi %s404, %s404
                  %s443 = sphi %s409, %s409
                $region142: #{liaf_resblock_forward.7} parent=138 // loop_header_branch
                  %440 = sbr.rel (%p438) target = $region146
                $region143: #{liaf_resblock_forward.7} parent=138 // loop_body
                  %v444 = vld [vmem:[%s442] sm:$0xff]
                  %445 = vst [vmem:[%s443] sm:$0xff] %v444
                  %v446 = vld [vmem:[%s442 + $0x8] sm:$0xff]
                  %447 = vst [vmem:[%s443 + $0x10] sm:$0xff] %v446
                  %v448 = vld [vmem:[%s442 + $0x10] sm:$0xff]
                  %449 = vst [vmem:[%s443 + $0x20] sm:$0xff] %v448
                  %v450 = vld [vmem:[%s442 + $0x18] sm:$0xff]
                  %451 = vst [vmem:[%s443 + $0x30] sm:$0xff] %v450
                $region144: #{liaf_resblock_forward.7} parent=138 // loop_footer
                  %s441 = sadd.s32 1, %s437
                $region145: #{liaf_resblock_forward.7} parent=138 // loop_footer_branch
                  %436 = sbr.rel target = $region141
                $region146: #{liaf_resblock_forward.7} parent=138 // loop_exit
                  _
              $region139: #{liaf_resblock_forward.7} parent=123 // pred_fallthru
                _
              // Predicated region
              $region147: #{liaf_resblock_forward.7} parent=123 // pred_check
                _
              $region148: #{liaf_resblock_forward.7} parent=123 // pred_check_branch
                %453 = sbr.rel target = $region150
              $region149: #{liaf_resblock_forward.7} parent=123 // pred_region
                _
              $region150: #{liaf_resblock_forward.7} parent=123 // pred_fallthru
                _
            $region124: #{liaf_resblock_forward.7} parent=119 // pred_fallthru
              _
            // Predicated region
            $region125: #{liaf_resblock_forward.7} parent=119 // pred_check
              _
            $region126: #{liaf_resblock_forward.7} parent=119 // pred_check_branch
              %415 = sbr.rel target = $region128
            $region127: #{liaf_resblock_forward.7} parent=119 // pred_region
              %s417 = ssub.s32 256, 1
              loop: start=0, step=1, limit=1
              $region129: #{liaf_resblock_forward.7} parent=127 // loop_pre_header
                _
              $region130: #{liaf_resblock_forward.7} parent=127 // loop_header
                %s419 = sphi 0, %s423
                %p420 = scmp.ge.s32.totalorder %s419, 1
                %s424 = sphi %s404, %s404
                %s425 = sphi %s409, %s409
              $region131: #{liaf_resblock_forward.7} parent=127 // loop_header_branch
                %422 = sbr.rel (%p420) target = $region135
              $region132: #{liaf_resblock_forward.7} parent=127 // loop_body
                %v426 = vld [vmem:[%s424] sm:%s417]
                %427 = vst [vmem:[%s425] sm:%s417] %v426
                %v428 = vld [vmem:[%s424 + $0x8] sm:%s417]
                %429 = vst [vmem:[%s425 + $0x10] sm:%s417] %v428
                %v430 = vld [vmem:[%s424 + $0x10] sm:%s417]
                %431 = vst [vmem:[%s425 + $0x20] sm:%s417] %v430
                %v432 = vld [vmem:[%s424 + $0x18] sm:%s417]
                %433 = vst [vmem:[%s425 + $0x30] sm:%s417] %v432
              $region133: #{liaf_resblock_forward.7} parent=127 // loop_footer
                %s423 = sadd.s32 1, %s419
              $region134: #{liaf_resblock_forward.7} parent=127 // loop_footer_branch
                %418 = sbr.rel target = $region130
              $region135: #{liaf_resblock_forward.7} parent=127 // loop_exit
                _
            $region128: #{liaf_resblock_forward.7} parent=119 // pred_fallthru
              _
          $region120: #{liaf_resblock_forward.7} parent=115 // pred_fallthru
            _
          %454 = vnop
        $region116: #{liaf_resblock_forward.7} parent=103 // pred_fallthru
          _
      $region104: #{liaf_resblock_forward.7} parent=5 // pred_fallthru
        _
      %p455 = scmp.le.s32.totalorder 2, %s10
      // Predicated region
      $region151: #{liaf_resblock_forward.7} parent=5 // pred_check
        %p456 = pneg %p455
      $region152: #{liaf_resblock_forward.7} parent=5 // pred_check_branch
        %458 = sbr.rel (%p456) target = $region154
      $region153: #{liaf_resblock_forward.7} parent=5 // pred_region
        %s459 = ssub.s32 %s10, 2
        // Predicated region
        $region155: #{liaf_resblock_forward.7} parent=153 // pred_check
          %p460 = pneg %p133
        $region156: #{liaf_resblock_forward.7} parent=153 // pred_check_branch
          %462 = sbr.rel (%p460) target = $region158
        $region157: #{liaf_resblock_forward.7} parent=153 // pred_region
          %s463 = sand.u32 %s118, 1
          %s464 = sand.u32 %s118, 1
          %s465 = smul.addr %s464, 32
          %s466 = scalar_lea.vmem [#allocation4], %s465
        $region158: #{liaf_resblock_forward.7} parent=153 // pred_fallthru
          _
      $region154: #{liaf_resblock_forward.7} parent=5 // pred_fallthru
        _
    $region6: #{liaf_resblock_forward.7} parent=1 // loop_footer
      %s14 = sadd.s32 1, %s10
    $region7: #{liaf_resblock_forward.7} parent=1 // loop_footer_branch
      %9 = sbr.rel target = $region3
    $region8: #{liaf_resblock_forward.7} parent=1 // loop_exit
      _

// kernel: liaf_resblock_forward.5
$region0: #{liaf_resblock_forward.5}
  #allocation0 [shape = 'u32[]', space=smem, size = 0x4, offset = 0x4, fixed_abs, tag = 'smem constant byte address 0x4 - core index']
  #allocation1 [shape = 'u32[72,128]{1,0:T(1,128)}', space=vmem, size = 0x9000, scoped, tag = 'internal scratch']
  %s0 = inlined_call_operand.vmem [shape: f32[4,16,64], index: 0, kind: input, shape index: {}]
  %s1 = inlined_call_operand.vmem [shape: f32[1,64], index: 1, kind: input, shape index: {}]
  %s2 = inlined_call_operand.vmem [shape: f32[1,64], index: 2, kind: input, shape index: {}]
  %s3 = inlined_call_operand.vmem [shape: f32[4,16,64], index: 3, kind: output, shape index: {}]
  %s4 = sld [smem:[#allocation0]]
  $region117: #{liaf_resblock_forward.5} parent=0
    _
  %s6 = ssub.s32 1, %s4
  %s7 = scalar_select 0, %s6, %s4
  $region1: #{liaf_resblock_forward.5} parent=0
    #allocation2 [shape = 'u8[32768]{0}', space=vmem, size = 0x8000, scoped, tag = 'input window, operand 0']
    #allocation3 [shape = 'u8[32768]{0}', space=vmem, size = 0x8000, scoped, tag = 'output window, operand 0']
    loop: start=0, step=1, limit=4
    $region2: #{liaf_resblock_forward.5} parent=1 // loop_pre_header
      _
    $region3: #{liaf_resblock_forward.5} parent=1 // loop_header
      %s9 = sphi 0, %s13
      %p10 = scmp.ge.s32.totalorder %s9, 4
      %s19 = sphi 0, %s21
      %s22 = sphi 0, %s19
      %s23 = sphi 0, %s22
      %s39 = sphi 0, %s23
      %s43 = sphi 0, %s43
      %s45 = sphi 0, %s43
      %s46 = sphi 0, %s45
      %s60 = sphi 0, %s46
      %s64 = sphi 0, %s64
      %s66 = sphi 0, %s64
      %s67 = sphi 0, %s66
      %s81 = sphi 0, %s67
      %s87 = sphi 0, %s89
      %s90 = sphi 0, %s87
      %s91 = sphi 0, %s90
      %s107 = sphi 0, %s91
    $region4: #{liaf_resblock_forward.5} parent=1 // loop_header_branch
      %12 = sbr.rel (%p10) target = $region8
    $region5: #{liaf_resblock_forward.5} parent=1 // loop_body
      %s14 = ssub.s32 %s9, 1
      %s15 = ssub.s32 %s9, 2
      %s16 = sadd.s32 %s9, 1
      %s17 = ssub.s32 %s9, %s16
      %p18 = scmp.eq.s32.totalorder %s17, 0
      %s20 = sadd.s32 %s19, 1
      %s21 = scalar_select %p18, %s19, %s20
      %p24 = pneg %p18
      %p25 = scmp.eq.s32.totalorder %s9, 1
      %p26 = por %p24, %p25
      %p27 = scmp.ne.s32.totalorder %s19, %s22
      %p28 = scmp.eq.s32.totalorder %s9, 0
      %p29 = por %p27, %p28
      %p30 = scmp.ne.s32.totalorder %s19, %s22
      %p31 = scmp.eq.s32.totalorder %s14, 1
      %p32 = por %p30, %p31
      %p33 = scmp.ne.s32.totalorder %s22, %s23
      %p34 = scmp.eq.s32.totalorder %s14, 0
      %p35 = por %p33, %p34
      %p36 = scmp.ne.s32.totalorder %s22, %s23
      %p37 = scmp.eq.s32.totalorder %s15, 1
      %p38 = por %p36, %p37
      %p40 = scmp.ne.s32.totalorder %s23, %s39
      %p41 = scmp.eq.s32.totalorder %s15, 0
      %p42 = por %p40, %p41
      %s44 = sadd.s32 %s43, 1
      %p47 = scmp.eq.s32.totalorder %s9, 1
      %p48 = scmp.ne.s32.totalorder %s43, %s45
      %p49 = scmp.eq.s32.totalorder %s9, 0
      %p50 = por %p48, %p49
      %p51 = scmp.ne.s32.totalorder %s43, %s45
      %p52 = scmp.eq.s32.totalorder %s14, 1
      %p53 = por %p51, %p52
      %p54 = scmp.ne.s32.totalorder %s45, %s46
      %p55 = scmp.eq.s32.totalorder %s14, 0
      %p56 = por %p54, %p55
      %p57 = scmp.ne.s32.totalorder %s45, %s46
      %p58 = scmp.eq.s32.totalorder %s15, 1
      %p59 = por %p57, %p58
      %p61 = scmp.ne.s32.totalorder %s46, %s60
      %p62 = scmp.eq.s32.totalorder %s15, 0
      %p63 = por %p61, %p62
      %s65 = sadd.s32 %s64, 1
      %p68 = scmp.eq.s32.totalorder %s9, 1
      %p69 = scmp.ne.s32.totalorder %s64, %s66
      %p70 = scmp.eq.s32.totalorder %s9, 0
      %p71 = por %p69, %p70
      %p72 = scmp.ne.s32.totalorder %s64, %s66
      %p73 = scmp.eq.s32.totalorder %s14, 1
      %p74 = por %p72, %p73
      %p75 = scmp.ne.s32.totalorder %s66, %s67
      %p76 = scmp.eq.s32.totalorder %s14, 0
      %p77 = por %p75, %p76
      %p78 = scmp.ne.s32.totalorder %s66, %s67
      %p79 = scmp.eq.s32.totalorder %s15, 1
      %p80 = por %p78, %p79
      %p82 = scmp.ne.s32.totalorder %s67, %s81
      %p83 = scmp.eq.s32.totalorder %s15, 0
      %p84 = por %p82, %p83
      %s85 = ssub.s32 %s9, %s16
      %p86 = scmp.eq.s32.totalorder %s85, 0
      %s88 = sadd.s32 %s87, 1
      %s89 = scalar_select %p86, %s87, %s88
      %p92 = pneg %p86
      %p93 = scmp.eq.s32.totalorder %s9, 1
      %p94 = por %p92, %p93
      %p95 = scmp.ne.s32.totalorder %s87, %s90
      %p96 = scmp.eq.s32.totalorder %s9, 0
      %p97 = por %p95, %p96
      %p98 = scmp.ne.s32.totalorder %s87, %s90
      %p99 = scmp.eq.s32.totalorder %s14, 1
      %p100 = por %p98, %p99
      %p101 = scmp.ne.s32.totalorder %s90, %s91
      %p102 = scmp.eq.s32.totalorder %s14, 0
      %p103 = por %p101, %p102
      %p104 = scmp.ne.s32.totalorder %s90, %s91
      %p105 = scmp.eq.s32.totalorder %s15, 1
      %p106 = por %p104, %p105
      %p108 = scmp.ne.s32.totalorder %s91, %s107
      %p109 = scmp.eq.s32.totalorder %s15, 0
      %p110 = por %p108, %p109
      %p111 = scmp.le.s32.totalorder 1, %s9
      %p112 = scmp.lt.s32.totalorder %s9, 3
      %p113 = pnand %p111, %p112
      %p114 = pneg %p113
      // Predicated region
      $region9: #{liaf_resblock_forward.5} parent=5 // pred_check
        _
      $region10: #{liaf_resblock_forward.5} parent=5 // pred_check_branch
        %116 = sbr.rel (%p113) target = $region12
      $region11: #{liaf_resblock_forward.5} parent=5 // pred_region
        %s117 = ssub.s32 %s9, 1
        // Predicated region
        $region13: #{liaf_resblock_forward.5} parent=11 // pred_check
          %p118 = pneg %p56
        $region14: #{liaf_resblock_forward.5} parent=11 // pred_check_branch
          %120 = sbr.rel (%p118) target = $region16
        $region15: #{liaf_resblock_forward.5} parent=11 // pred_region
          _
        $region16: #{liaf_resblock_forward.5} parent=11 // pred_fallthru
          _
        // Predicated region
        $region17: #{liaf_resblock_forward.5} parent=11 // pred_check
          %p121 = pneg %p77
        $region18: #{liaf_resblock_forward.5} parent=11 // pred_check_branch
          %123 = sbr.rel (%p121) target = $region20
        $region19: #{liaf_resblock_forward.5} parent=11 // pred_region
          _
        $region20: #{liaf_resblock_forward.5} parent=11 // pred_fallthru
          _
      $region12: #{liaf_resblock_forward.5} parent=5 // pred_fallthru
        _
      %p124 = scmp.lt.s32.totalorder %s9, 2
      // Predicated region
      $region21: #{liaf_resblock_forward.5} parent=5 // pred_check
        %p125 = pneg %p124
      $region22: #{liaf_resblock_forward.5} parent=5 // pred_check_branch
        %127 = sbr.rel (%p125) target = $region24
      $region23: #{liaf_resblock_forward.5} parent=5 // pred_region
        // Predicated region
        $region25: #{liaf_resblock_forward.5} parent=23 // pred_check
          %p128 = pneg %p29
        $region26: #{liaf_resblock_forward.5} parent=23 // pred_check_branch
          %130 = sbr.rel (%p128) target = $region28
        $region27: #{liaf_resblock_forward.5} parent=23 // pred_region
          %s131 = sand.u32 %s19, 1
          %s132 = sand.u32 %s19, 1
          %s133 = smul.addr %s132, 32
          %s134 = scalar_lea.vmem [#allocation2], %s133
          %s135 = smul.addr %s9, 8
          %s136 = scalar_lea.vmem %s0, %s135
          // Predicated region
          $region29: #{liaf_resblock_forward.5} parent=27 // pred_check
            _
          $region30: #{liaf_resblock_forward.5} parent=27 // pred_check_branch
            %138 = sbr.rel (0) target = $region32
          $region31: #{liaf_resblock_forward.5} parent=27 // pred_region
            // Predicated region
            $region33: #{liaf_resblock_forward.5} parent=31 // pred_check
              _
            $region34: #{liaf_resblock_forward.5} parent=31 // pred_check_branch
              %140 = sbr.rel (0) target = $region36
            $region35: #{liaf_resblock_forward.5} parent=31 // pred_region
              // Predicated region
              $region48: #{liaf_resblock_forward.5} parent=35 // pred_check
                _
              $region49: #{liaf_resblock_forward.5} parent=35 // pred_check_branch
                %162 = sbr.rel (0) target = $region51
              $region50: #{liaf_resblock_forward.5} parent=35 // pred_region
                loop: start=0, step=1, limit=1
                $region52: #{liaf_resblock_forward.5} parent=50 // loop_pre_header
                  _
                $region53: #{liaf_resblock_forward.5} parent=50 // loop_header
                  %s164 = sphi 0, %s168
                  %p165 = scmp.ge.s32.totalorder %s164, 1
                  %s169 = sphi %s136, %s136
                  %s170 = sphi %s134, %s134
                $region54: #{liaf_resblock_forward.5} parent=50 // loop_header_branch
                  %167 = sbr.rel (%p165) target = $region58
                $region55: #{liaf_resblock_forward.5} parent=50 // loop_body
                  %v171 = vld [vmem:[%s169] sm:$0xff]
                  %172 = vst [vmem:[%s170] sm:$0xff] %v171
                  %v173 = vld [vmem:[%s169 + $0x10] sm:$0xff]
                  %174 = vst [vmem:[%s170 + $0x8] sm:$0xff] %v173
                  %v175 = vld [vmem:[%s169 + $0x20] sm:$0xff]
                  %176 = vst [vmem:[%s170 + $0x10] sm:$0xff] %v175
                  %v177 = vld [vmem:[%s169 + $0x30] sm:$0xff]
                  %178 = vst [vmem:[%s170 + $0x18] sm:$0xff] %v177
                $region56: #{liaf_resblock_forward.5} parent=50 // loop_footer
                  %s168 = sadd.s32 1, %s164
                $region57: #{liaf_resblock_forward.5} parent=50 // loop_footer_branch
                  %163 = sbr.rel target = $region53
                $region58: #{liaf_resblock_forward.5} parent=50 // loop_exit
                  _
              $region51: #{liaf_resblock_forward.5} parent=35 // pred_fallthru
                _
              // Predicated region
              $region59: #{liaf_resblock_forward.5} parent=35 // pred_check
                _
              $region60: #{liaf_resblock_forward.5} parent=35 // pred_check_branch
                %180 = sbr.rel target = $region62
              $region61: #{liaf_resblock_forward.5} parent=35 // pred_region
                _
              $region62: #{liaf_resblock_forward.5} parent=35 // pred_fallthru
                _
            $region36: #{liaf_resblock_forward.5} parent=31 // pred_fallthru
              _
            // Predicated region
            $region37: #{liaf_resblock_forward.5} parent=31 // pred_check
              _
            $region38: #{liaf_resblock_forward.5} parent=31 // pred_check_branch
              %142 = sbr.rel target = $region40
            $region39: #{liaf_resblock_forward.5} parent=31 // pred_region
              %s144 = ssub.s32 256, 1
              loop: start=0, step=1, limit=1
              $region41: #{liaf_resblock_forward.5} parent=39 // loop_pre_header
                _
              $region42: #{liaf_resblock_forward.5} parent=39 // loop_header
                %s146 = sphi 0, %s150
                %p147 = scmp.ge.s32.totalorder %s146, 1
                %s151 = sphi %s136, %s136
                %s152 = sphi %s134, %s134
              $region43: #{liaf_resblock_forward.5} parent=39 // loop_header_branch
                %149 = sbr.rel (%p147) target = $region47
              $region44: #{liaf_resblock_forward.5} parent=39 // loop_body
                %v153 = vld [vmem:[%s151] sm:%s144]
                %154 = vst [vmem:[%s152] sm:%s144] %v153
                %v155 = vld [vmem:[%s151 + $0x10] sm:%s144]
                %156 = vst [vmem:[%s152 + $0x8] sm:%s144] %v155
                %v157 = vld [vmem:[%s151 + $0x20] sm:%s144]
                %158 = vst [vmem:[%s152 + $0x10] sm:%s144] %v157
                %v159 = vld [vmem:[%s151 + $0x30] sm:%s144]
                %160 = vst [vmem:[%s152 + $0x18] sm:%s144] %v159
              $region45: #{liaf_resblock_forward.5} parent=39 // loop_footer
                %s150 = sadd.s32 1, %s146
              $region46: #{liaf_resblock_forward.5} parent=39 // loop_footer_branch
                %145 = sbr.rel target = $region42
              $region47: #{liaf_resblock_forward.5} parent=39 // loop_exit
                _
            $region40: #{liaf_resblock_forward.5} parent=31 // pred_fallthru
              _
          $region32: #{liaf_resblock_forward.5} parent=27 // pred_fallthru
            _
          %181 = vnop
        $region28: #{liaf_resblock_forward.5} parent=23 // pred_fallthru
          _
      $region24: #{liaf_resblock_forward.5} parent=5 // pred_fallthru
        _
      %p182 = scmp.le.s32.totalorder 1, %s9
      %p183 = scmp.lt.s32.totalorder %s9, 3
      %p184 = pnand %p182, %p183
      %p185 = pneg %p184
      // Predicated region
      $region63: #{liaf_resblock_forward.5} parent=5 // pred_check
        _
      $region64: #{liaf_resblock_forward.5} parent=5 // pred_check_branch
        %187 = sbr.rel (%p184) target = $region66
      $region65: #{liaf_resblock_forward.5} parent=5 // pred_region
        %s188 = ssub.s32 %s9, 1
        %s189 = sand.u32 %s22, 1
        %s190 = sand.u32 %s22, 1
        %s191 = smul.addr %s190, 32
        %s192 = scalar_lea.vmem [#allocation2], %s191
        // Predicated region
        $region67: #{liaf_resblock_forward.5} parent=65 // pred_check
          %p193 = pneg %p35
        $region68: #{liaf_resblock_forward.5} parent=65 // pred_check_branch
          %195 = sbr.rel (%p193) target = $region70
        $region69: #{liaf_resblock_forward.5} parent=65 // pred_region
          _
        $region70: #{liaf_resblock_forward.5} parent=65 // pred_fallthru
          _
        %s196 = sand.u32 %s22, 1
        %s197 = sand.u32 %s22, 1
        %s198 = smul.addr %s197, 32
        %s199 = scalar_lea.vmem [#allocation2], %s198
        %p200 = pneg %p35
        %p201 = pneg %p32
        %p202 = pneg %p56
        %p203 = pneg %p53
        %p204 = pneg %p77
        %p205 = pneg %p74
        %p206 = pneg %p103
        %p207 = pneg %p100
        %s208 = sand.u32 %s90, 1
        %s209 = sand.u32 %s90, 1
        %s210 = smul.addr %s209, 32
        %s211 = scalar_lea.vmem [#allocation3], %s210
        %v212 = vld [vmem:[%s1] sm:$0x1]
        %v214 = vperm.slane %v212, 0
        %v216 = vld [vmem:[%s2] sm:$0x1]
        %v218 = vperm.slane %v216, 0
        %v220 = vld [vmem:[%s192] sm:$0xff]
        %v221 = vmul.f32 %v220, %v214
        %v222 = vadd.f32 %v221, %v218
        %vm223 = vcmp.gt.f32.partialorder %v222, 0.5
        %v224 = vsel %vm223, 1, 0
        %v225 = vcvt.s32.f32 %v224
        %v226 = vmax.f32 %v222, 0.0
        %v227 = vmin.f32 %v226, 1.0
        %vm228 = vcmask 523264
        %229 = vst.msk [vmem:[%s211] sm:$0xff] %vm228, %v227
        %v230 = vmul.f32 %v222, 0.62245935
        %v231 = vsub.f32 1.0, %v225
        %v232 = vmul.f32 %v230, %v231
        %s233 = scalar_lea.vmem %s192, 8 [#allocation2]
        %v234 = vld [vmem:[%s233] sm:$0xff]
        %v235 = vmul.f32 %v234, %v214
        %v236 = vadd.f32 %v235, %v218
        %v237 = vadd.f32 %v232, %v236
        %vm238 = vcmp.gt.f32.partialorder %v237, 0.5
        %v239 = vsel %vm238, 1, 0
        %v240 = vcvt.s32.f32 %v239
        %v241 = vmax.f32 %v237, 0.0
        %v242 = vmin.f32 %v241, 1.0
        %s243 = scalar_lea.vmem %s211, 8 [#allocation3]
        %244 = vst.msk [vmem:[%s243] sm:$0xff] %vm228, %v242
        %v245 = vmul.f32 %v237, 0.62245935
        %v246 = vsub.f32 1.0, %v240
        %v247 = vmul.f32 %v245, %v246
        %s248 = scalar_lea.vmem %s192, 16 [#allocation2]
        %v249 = vld [vmem:[%s248] sm:$0xff]
        %v250 = vmul.f32 %v249, %v214
        %v251 = vadd.f32 %v250, %v218
        %v252 = vadd.f32 %v247, %v251
        %vm253 = vcmp.gt.f32.partialorder %v252, 0.5
        %v254 = vsel %vm253, 1, 0
        %v255 = vcvt.s32.f32 %v254
        %v256 = vmax.f32 %v252, 0.0
        %v257 = vmin.f32 %v256, 1.0
        %s258 = scalar_lea.vmem %s211, 16 [#allocation3]
        %259 = vst.msk [vmem:[%s258] sm:$0xff] %vm228, %v257
        %v260 = vmul.f32 %v252, 0.62245935
        %v261 = vsub.f32 1.0, %v255
        %v262 = vmul.f32 %v260, %v261
        %s263 = scalar_lea.vmem %s192, 24 [#allocation2]
        %v264 = vld [vmem:[%s263] sm:$0xff]
        %v265 = vmul.f32 %v264, %v214
        %v266 = vadd.f32 %v265, %v218
        %v267 = vadd.f32 %v262, %v266
        %v268 = vmax.f32 %v267, 0.0
        %v269 = vmin.f32 %v268, 1.0
        %s270 = scalar_lea.vmem %s211, 24 [#allocation3]
        %271 = vst.msk [vmem:[%s270] sm:$0xff] %vm228, %v269
        %s272 = sand.u32 %s90, 1
        %s273 = sand.u32 %s90, 1
        %s274 = smul.addr %s273, 32
        %s275 = scalar_lea.vmem [#allocation3], %s274
        // Predicated region
        $region71: #{liaf_resblock_forward.5} parent=65 // pred_check
          %p276 = pneg %p100
        $region72: #{liaf_resblock_forward.5} parent=65 // pred_check_branch
          %278 = sbr.rel (%p276) target = $region74
        $region73: #{liaf_resblock_forward.5} parent=65 // pred_region
          %s279 = smul.addr %s14, 8
          %s280 = scalar_lea.vmem %s3, %s279
          // Predicated region
          $region75: #{liaf_resblock_forward.5} parent=73 // pred_check
            _
          $region76: #{liaf_resblock_forward.5} parent=73 // pred_check_branch
            %282 = sbr.rel (0) target = $region78
          $region77: #{liaf_resblock_forward.5} parent=73 // pred_region
            // Predicated region
            $region79: #{liaf_resblock_forward.5} parent=77 // pred_check
              _
            $region80: #{liaf_resblock_forward.5} parent=77 // pred_check_branch
              %284 = sbr.rel (0) target = $region82
            $region81: #{liaf_resblock_forward.5} parent=77 // pred_region
              // Predicated region
              $region94: #{liaf_resblock_forward.5} parent=81 // pred_check
                _
              $region95: #{liaf_resblock_forward.5} parent=81 // pred_check_branch
                %306 = sbr.rel (0) target = $region97
              $region96: #{liaf_resblock_forward.5} parent=81 // pred_region
                loop: start=0, step=1, limit=1
                $region98: #{liaf_resblock_forward.5} parent=96 // loop_pre_header
                  _
                $region99: #{liaf_resblock_forward.5} parent=96 // loop_header
                  %s308 = sphi 0, %s312
                  %p309 = scmp.ge.s32.totalorder %s308, 1
                  %s313 = sphi %s275, %s275
                  %s314 = sphi %s280, %s280
                $region100: #{liaf_resblock_forward.5} parent=96 // loop_header_branch
                  %311 = sbr.rel (%p309) target = $region104
                $region101: #{liaf_resblock_forward.5} parent=96 // loop_body
                  %v315 = vld [vmem:[%s313] sm:$0xff]
                  %316 = vst [vmem:[%s314] sm:$0xff] %v315
                  %v317 = vld [vmem:[%s313 + $0x8] sm:$0xff]
                  %318 = vst [vmem:[%s314 + $0x10] sm:$0xff] %v317
                  %v319 = vld [vmem:[%s313 + $0x10] sm:$0xff]
                  %320 = vst [vmem:[%s314 + $0x20] sm:$0xff] %v319
                  %v321 = vld [vmem:[%s313 + $0x18] sm:$0xff]
                  %322 = vst [vmem:[%s314 + $0x30] sm:$0xff] %v321
                $region102: #{liaf_resblock_forward.5} parent=96 // loop_footer
                  %s312 = sadd.s32 1, %s308
                $region103: #{liaf_resblock_forward.5} parent=96 // loop_footer_branch
                  %307 = sbr.rel target = $region99
                $region104: #{liaf_resblock_forward.5} parent=96 // loop_exit
                  _
              $region97: #{liaf_resblock_forward.5} parent=81 // pred_fallthru
                _
              // Predicated region
              $region105: #{liaf_resblock_forward.5} parent=81 // pred_check
                _
              $region106: #{liaf_resblock_forward.5} parent=81 // pred_check_branch
                %324 = sbr.rel target = $region108
              $region107: #{liaf_resblock_forward.5} parent=81 // pred_region
                _
              $region108: #{liaf_resblock_forward.5} parent=81 // pred_fallthru
                _
            $region82: #{liaf_resblock_forward.5} parent=77 // pred_fallthru
              _
            // Predicated region
            $region83: #{liaf_resblock_forward.5} parent=77 // pred_check
              _
            $region84: #{liaf_resblock_forward.5} parent=77 // pred_check_branch
              %286 = sbr.rel target = $region86
            $region85: #{liaf_resblock_forward.5} parent=77 // pred_region
              %s288 = ssub.s32 256, 1
              loop: start=0, step=1, limit=1
              $region87: #{liaf_resblock_forward.5} parent=85 // loop_pre_header
                _
              $region88: #{liaf_resblock_forward.5} parent=85 // loop_header
                %s290 = sphi 0, %s294
                %p291 = scmp.ge.s32.totalorder %s290, 1
                %s295 = sphi %s275, %s275
                %s296 = sphi %s280, %s280
              $region89: #{liaf_resblock_forward.5} parent=85 // loop_header_branch
                %293 = sbr.rel (%p291) target = $region93
              $region90: #{liaf_resblock_forward.5} parent=85 // loop_body
                %v297 = vld [vmem:[%s295] sm:%s288]
                %298 = vst [vmem:[%s296] sm:%s288] %v297
                %v299 = vld [vmem:[%s295 + $0x8] sm:%s288]
                %300 = vst [vmem:[%s296 + $0x10] sm:%s288] %v299
                %v301 = vld [vmem:[%s295 + $0x10] sm:%s288]
                %302 = vst [vmem:[%s296 + $0x20] sm:%s288] %v301
                %v303 = vld [vmem:[%s295 + $0x18] sm:%s288]
                %304 = vst [vmem:[%s296 + $0x30] sm:%s288] %v303
              $region91: #{liaf_resblock_forward.5} parent=85 // loop_footer
                %s294 = sadd.s32 1, %s290
              $region92: #{liaf_resblock_forward.5} parent=85 // loop_footer_branch
                %289 = sbr.rel target = $region88
              $region93: #{liaf_resblock_forward.5} parent=85 // loop_exit
                _
            $region86: #{liaf_resblock_forward.5} parent=77 // pred_fallthru
              _
          $region78: #{liaf_resblock_forward.5} parent=73 // pred_fallthru
            _
          %325 = vnop
        $region74: #{liaf_resblock_forward.5} parent=65 // pred_fallthru
          _
      $region66: #{liaf_resblock_forward.5} parent=5 // pred_fallthru
        _
      %p326 = scmp.le.s32.totalorder 2, %s9
      // Predicated region
      $region109: #{liaf_resblock_forward.5} parent=5 // pred_check
        %p327 = pneg %p326
      $region110: #{liaf_resblock_forward.5} parent=5 // pred_check_branch
        %329 = sbr.rel (%p327) target = $region112
      $region111: #{liaf_resblock_forward.5} parent=5 // pred_region
        %s330 = ssub.s32 %s9, 2
        // Predicated region
        $region113: #{liaf_resblock_forward.5} parent=111 // pred_check
          %p331 = pneg %p106
        $region114: #{liaf_resblock_forward.5} parent=111 // pred_check_branch
          %333 = sbr.rel (%p331) target = $region116
        $region115: #{liaf_resblock_forward.5} parent=111 // pred_region
          %s334 = sand.u32 %s91, 1
          %s335 = sand.u32 %s91, 1
          %s336 = smul.addr %s335, 32
          %s337 = scalar_lea.vmem [#allocation3], %s336
        $region116: #{liaf_resblock_forward.5} parent=111 // pred_fallthru
          _
      $region112: #{liaf_resblock_forward.5} parent=5 // pred_fallthru
        _
    $region6: #{liaf_resblock_forward.5} parent=1 // loop_footer
      %s13 = sadd.s32 1, %s9
    $region7: #{liaf_resblock_forward.5} parent=1 // loop_footer_branch
      %8 = sbr.rel target = $region3
    $region8: #{liaf_resblock_forward.5} parent=1 // loop_exit
      _

// kernel: liaf_resblock_forward.4
$region0: #{liaf_resblock_forward.4}
  #allocation0 [shape = 'u32[]', space=smem, size = 0x4, offset = 0x4, fixed_abs, tag = 'smem constant byte address 0x4 - core index']
  #allocation1 [shape = 'u32[72,128]{1,0:T(1,128)}', space=vmem, size = 0x9000, scoped, tag = 'internal scratch']
  %s0 = inlined_call_operand.vmem [shape: f32[8,8,64], index: 0, kind: input, shape index: {}]
  %s1 = inlined_call_operand.vmem [shape: bf16[3,64,64], index: 1, kind: input, shape index: {}]
  %s2 = inlined_call_operand.vmem [shape: f32[1,64], index: 2, kind: input, shape index: {}]
  %s3 = inlined_call_operand.vmem [shape: f32[8,8,64], index: 3, kind: output, shape index: {0}]
  %s4 = inlined_call_operand.vmem [shape: f32[1,64], index: 4, kind: output, shape index: {1}]
  %s5 = inlined_call_operand.vmem [shape: f32[1,64], index: 5, kind: output, shape index: {2}]
  %6 = xla_tuple %s3, %s4, %s5
  %s7 = sld [smem:[#allocation0]]
  $region38: #{liaf_resblock_forward.4} parent=0
    _
  %s9 = ssub.s32 1, %s7
  %s10 = scalar_select 0, %s9, %s7
  // Predicated region
  $region2: #{liaf_resblock_forward.4} parent=0 // pred_check
    _
  $region3: #{liaf_resblock_forward.4} parent=0 // pred_check_branch
    %12 = sbr.rel (0) target = $region5
  $region4: #{liaf_resblock_forward.4} parent=0 // pred_region
    _
  $region5: #{liaf_resblock_forward.4} parent=0 // pred_fallthru
    _
  // Predicated region
  $region6: #{liaf_resblock_forward.4} parent=0 // pred_check
    _
  $region7: #{liaf_resblock_forward.4} parent=0 // pred_check_branch
    %14 = sbr.rel (0) target = $region9
  $region8: #{liaf_resblock_forward.4} parent=0 // pred_region
    _
  $region9: #{liaf_resblock_forward.4} parent=0 // pred_fallthru
    _
  // Predicated region
  $region10: #{liaf_resblock_forward.4} parent=0 // pred_check
    _
  $region11: #{liaf_resblock_forward.4} parent=0 // pred_check_branch
    %16 = sbr.rel (0) target = $region13
  $region12: #{liaf_resblock_forward.4} parent=0 // pred_region
    _
  $region13: #{liaf_resblock_forward.4} parent=0 // pred_fallthru
    _
  %v18 = vld [vmem:[%s0] sm:$0xff]
  %v19 = vld [vmem:[%s0 + $0x8] sm:$0xff]
  %v20 = vld [vmem:[%s0 + $0x10] sm:$0xff]
  %v21 = vld [vmem:[%s0 + $0x18] sm:$0xff]
  %v22 = vld [vmem:[%s0 + $0x20] sm:$0xff]
  %v23 = vld [vmem:[%s0 + $0x28] sm:$0xff]
  %v24 = vld [vmem:[%s0 + $0x30] sm:$0xff]
  %v25 = vld [vmem:[%s0 + $0x38] sm:$0xff]
  %v26 = vpack.c.bf16 %v19, %v18
  %v27 = vpack.c.bf16 %v21, %v20
  %v28 = vpack.c.bf16 %v23, %v22
  %v29 = vpack.c.bf16 %v25, %v24
  %v30 = vld [vmem:[%s1] sm:$0xf]
  %v31 = vld [vmem:[%s1 + $0x4] sm:$0xf]
  %v32 = vld [vmem:[%s1 + $0x8] sm:$0xf]
  %v33 = vld [vmem:[%s1 + $0xc] sm:$0xf]
  %v34 = vld [vmem:[%s1 + $0x10] sm:$0xf]
  %v35 = vld [vmem:[%s1 + $0x14] sm:$0xf]
  %v36 = vld [vmem:[%s1 + $0x18] sm:$0xf]
  %v37 = vld [vmem:[%s1 + $0x1c] sm:$0xf]
  %v46 = vunpack.c.l.b16 %v30
  %v47 = vunpack.c.l.b16 %v31
  %v48 = vunpack.c.l.b16 %v32
  %v49 = vunpack.c.l.b16 %v33
  %v50 = vunpack.c.l.b16 %v34
  %v51 = vunpack.c.l.b16 %v35
  %v52 = vunpack.c.l.b16 %v36
  %v53 = vunpack.c.l.b16 %v37
  %v54 = vpack.c.b16 %v47, %v46
  %v55 = vpack.c.b16 %v49, %v48
  %v56 = vpack.c.b16 %v51, %v50
  %v57 = vpack.c.b16 %v53, %v52
  %vm62 = vcmask 523264
  %v64 = vsel %vm62, %v26, 0
  %v67 = vsel %vm62, %v27, 0
  %v70 = vsel %vm62, %v28, 0
  %v73 = vsel %vm62, %v29, 0
  %75 = vmatpush.bf16.msra.mxu0 0
  %76 = vmatpush.bf16.msra.mxu0 0
  %77 = vmatpush.bf16.msra.mxu0 0
  %78 = vmatpush.bf16.msra.mxu0 0
  %79 = vmatpush.bf16.msra.mxu0 %v57
  %80 = vmatpush.bf16.msra.mxu0 %v56
  %81 = vmatpush.bf16.msra.mxu0 %v55
  %82 = vmatpush.bf16.msra.mxu0 %v54
  %83 = vmatmul.bf16.gmra.mxu0 %v64
  %v84 = vpop.f32.mrf.mxu0
  %v85 = vadd.f32 0.0, %v84
  %v86 = vpop.f32.mrf.mxu0
  %v87 = vadd.f32 0.0, %v86
  %88 = vmatmul.bf16.gmra.mxu0 %v67
  %v89 = vpop.f32.mrf.mxu0
  %v90 = vadd.f32 0.0, %v89
  %v91 = vpop.f32.mrf.mxu0
  %v92 = vadd.f32 0.0, %v91
  %93 = vmatmul.bf16.gmra.mxu0 %v70
  %v94 = vpop.f32.mrf.mxu0
  %v95 = vadd.f32 0.0, %v94
  %v96 = vpop.f32.mrf.mxu0
  %v97 = vadd.f32 0.0, %v96
  %98 = vmatmul.bf16.gmra.mxu0 %v73
  %v99 = vpop.f32.mrf.mxu0
  %v100 = vadd.f32 0.0, %v99
  %v101 = vpop.f32.mrf.mxu0
  %v102 = vadd.f32 0.0, %v101
  %103 = vdwg.mxu0
  %s104 = scalar_lea.vmem %s1, 32
  %v105 = vld [vmem:[%s104] sm:$0xf]
  %v106 = vld [vmem:[%s104 + $0x4] sm:$0xf]
  %v107 = vld [vmem:[%s104 + $0x8] sm:$0xf]
  %v108 = vld [vmem:[%s104 + $0xc] sm:$0xf]
  %v109 = vld [vmem:[%s104 + $0x10] sm:$0xf]
  %v110 = vld [vmem:[%s104 + $0x14] sm:$0xf]
  %v111 = vld [vmem:[%s104 + $0x18] sm:$0xf]
  %v112 = vld [vmem:[%s104 + $0x1c] sm:$0xf]
  %s113 = scalar_lea.vmem %s1, 64
  %v114 = vld [vmem:[%s113] sm:$0xf]
  %v115 = vld [vmem:[%s113 + $0x4] sm:$0xf]
  %v116 = vld [vmem:[%s113 + $0x8] sm:$0xf]
  %v117 = vld [vmem:[%s113 + $0xc] sm:$0xf]
  %v118 = vld [vmem:[%s113 + $0x10] sm:$0xf]
  %v119 = vld [vmem:[%s113 + $0x14] sm:$0xf]
  %v120 = vld [vmem:[%s113 + $0x18] sm:$0xf]
  %v121 = vld [vmem:[%s113 + $0x1c] sm:$0xf]
  %v130 = vunpack.c.l.b16 %v114
  %v131 = vunpack.c.l.b16 %v115
  %v132 = vunpack.c.l.b16 %v116
  %v133 = vunpack.c.l.b16 %v117
  %v134 = vunpack.c.l.b16 %v118
  %v135 = vunpack.c.l.b16 %v119
  %v136 = vunpack.c.l.b16 %v120
  %v137 = vunpack.c.l.b16 %v121
  %v138 = vpack.c.b16 %v131, %v130
  %v139 = vpack.c.b16 %v133, %v132
  %v140 = vpack.c.b16 %v135, %v134
  %v141 = vpack.c.b16 %v137, %v136
  %146 = vmatpush.bf16.msra.mxu0 0
  %147 = vmatpush.bf16.msra.mxu0 0
  %148 = vmatpush.bf16.msra.mxu0 0
  %149 = vmatpush.bf16.msra.mxu0 0
  %150 = vmatpush.bf16.msra.mxu0 %v141
  %151 = vmatpush.bf16.msra.mxu0 %v140
  %152 = vmatpush.bf16.msra.mxu0 %v139
  %153 = vmatpush.bf16.msra.mxu0 %v138
  %154 = vmatmul.bf16.gmra.mxu0 %v64
  %v155 = vpop.f32.mrf.mxu0
  %v156 = vadd.f32 0.0, %v155
  %v157 = vpop.f32.mrf.mxu0
  %v158 = vadd.f32 0.0, %v157
  %159 = vmatmul.bf16.gmra.mxu0 %v67
  %v160 = vpop.f32.mrf.mxu0
  %v161 = vadd.f32 0.0, %v160
  %v162 = vpop.f32.mrf.mxu0
  %v163 = vadd.f32 0.0, %v162
  %164 = vmatmul.bf16.gmra.mxu0 %v70
  %v165 = vpop.f32.mrf.mxu0
  %v166 = vadd.f32 0.0, %v165
  %v167 = vpop.f32.mrf.mxu0
  %v168 = vadd.f32 0.0, %v167
  %169 = vmatmul.bf16.gmra.mxu0 %v73
  %v170 = vpop.f32.mrf.mxu0
  %v171 = vadd.f32 0.0, %v170
  %v172 = vpop.f32.mrf.mxu0
  %v173 = vadd.f32 0.0, %v172
  %174 = vdwg.mxu0
  %v175 = vlaneseq
  %v176 = vshrl.u32 %v175, 7
  %vm177 = vcmp.eq.s32.totalorder %v176, 0
  %v178 = vrot.slane %v85, 7
  %v179 = vrot.slane %v87, 7
  %v180 = vrot.slane %v90, 7
  %v181 = vrot.slane %v92, 7
  %v182 = vrot.slane %v95, 7
  %v183 = vrot.slane %v97, 7
  %v184 = vrot.slane %v100, 7
  %v185 = vrot.slane %v102, 7
  %vm186 = vcmp.lt.s32.totalorder %v176, 1
  %v187 = vsel %vm186, %v184, %v185
  %v188 = vsel %vm186, %v183, %v184
  %v189 = vsel %vm186, %v182, %v183
  %v190 = vsel %vm186, %v181, %v182
  %v191 = vsel %vm186, %v180, %v181
  %v192 = vsel %vm186, %v179, %v180
  %v193 = vsel %vm186, %v178, %v179
  %v194 = vsel %vm186, %v185, %v178
  %v195 = vsel %vm177, 0.0, %v194
  %v196 = vsel %vm177, 0.0, %v193
  %v197 = vsel %vm177, 0.0, %v192
  %v198 = vsel %vm177, 0.0, %v191
  %v199 = vsel %vm177, 0.0, %v190
  %v200 = vsel %vm177, 0.0, %v189
  %v201 = vsel %vm177, 0.0, %v188
  %v202 = vsel %vm177, 0.0, %v187
  %v211 = vunpack.c.l.b16 %v105
  %v212 = vunpack.c.l.b16 %v106
  %v213 = vunpack.c.l.b16 %v107
  %v214 = vunpack.c.l.b16 %v108
  %v215 = vunpack.c.l.b16 %v109
  %v216 = vunpack.c.l.b16 %v110
  %v217 = vunpack.c.l.b16 %v111
  %v218 = vunpack.c.l.b16 %v112
  %v219 = vpack.c.b16 %v212, %v211
  %v220 = vpack.c.b16 %v214, %v213
  %v221 = vpack.c.b16 %v216, %v215
  %v222 = vpack.c.b16 %v218, %v217
  %227 = vmatpush.bf16.msra.mxu0 0
  %228 = vmatpush.bf16.msra.mxu0 0
  %229 = vmatpush.bf16.msra.mxu0 0
  %230 = vmatpush.bf16.msra.mxu0 0
  %231 = vmatpush.bf16.msra.mxu0 %v222
  %232 = vmatpush.bf16.msra.mxu0 %v221
  %233 = vmatpush.bf16.msra.mxu0 %v220
  %234 = vmatpush.bf16.msra.mxu0 %v219
  %235 = vmatmul.bf16.gmra.mxu0 %v64
  %v236 = vpop.f32.mrf.mxu0
  %v237 = vadd.f32 %v195, %v236
  %v238 = vpop.f32.mrf.mxu0
  %v239 = vadd.f32 %v196, %v238
  %240 = vmatmul.bf16.gmra.mxu0 %v67
  %v241 = vpop.f32.mrf.mxu0
  %v242 = vadd.f32 %v197, %v241
  %v243 = vpop.f32.mrf.mxu0
  %v244 = vadd.f32 %v198, %v243
  %245 = vmatmul.bf16.gmra.mxu0 %v70
  %v246 = vpop.f32.mrf.mxu0
  %v247 = vadd.f32 %v199, %v246
  %v248 = vpop.f32.mrf.mxu0
  %v249 = vadd.f32 %v200, %v248
  %250 = vmatmul.bf16.gmra.mxu0 %v73
  %v251 = vpop.f32.mrf.mxu0
  %v252 = vadd.f32 %v201, %v251
  %v253 = vpop.f32.mrf.mxu0
  %v254 = vadd.f32 %v202, %v253
  %255 = vdwg.mxu0
  %vm256 = vcmp.eq.s32.totalorder %v176, 7
  %v257 = vrot.slane %v156, 1
  %v258 = vrot.slane %v158, 1
  %v259 = vrot.slane %v161, 1
  %v260 = vrot.slane %v163, 1
  %v261 = vrot.slane %v166, 1
  %v262 = vrot.slane %v168, 1
  %v263 = vrot.slane %v171, 1
  %v264 = vrot.slane %v173, 1
  %vm265 = vcmp.lt.s32.totalorder %v176, 7
  %v266 = vsel %vm265, %v263, %v264
  %v267 = vsel %vm265, %v262, %v263
  %v268 = vsel %vm265, %v261, %v262
  %v269 = vsel %vm265, %v260, %v261
  %v270 = vsel %vm265, %v259, %v260
  %v271 = vsel %vm265, %v258, %v259
  %v272 = vsel %vm265, %v257, %v258
  %v273 = vsel %vm265, %v264, %v257
  %v274 = vsel %vm256, 0.0, %v272
  %v275 = vsel %vm256, 0.0, %v271
  %v276 = vsel %vm256, 0.0, %v270
  %v277 = vsel %vm256, 0.0, %v269
  %v278 = vsel %vm256, 0.0, %v268
  %v279 = vsel %vm256, 0.0, %v267
  %v280 = vsel %vm256, 0.0, %v266
  %v281 = vsel %vm256, 0.0, %v273
  %v282 = vadd.f32 %v237, %v274
  %v283 = vadd.f32 %v239, %v275
  %v284 = vadd.f32 %v242, %v276
  %v285 = vadd.f32 %v244, %v277
  %v286 = vadd.f32 %v247, %v278
  %v287 = vadd.f32 %v249, %v279
  %v288 = vadd.f32 %v252, %v280
  %v289 = vadd.f32 %v254, %v281
  %v290 = vsel %vm62, %v282, 0.0
  %v291 = vsel %vm62, %v283, 0.0
  %v292 = vadd.f32 %v290, %v291
  %v293 = vsel %vm62, %v284, 0.0
  %v294 = vadd.f32 %v292, %v293
  %v295 = vsel %vm62, %v285, 0.0
  %v296 = vadd.f32 %v294, %v295
  %v297 = vsel %vm62, %v286, 0.0
  %v298 = vadd.f32 %v296, %v297
  %v299 = vsel %vm62, %v287, 0.0
  %v300 = vadd.f32 %v298, %v299
  %v301 = vsel %vm62, %v288, 0.0
  %v302 = vadd.f32 %v300, %v301
  %v303 = vsel %vm62, %v289, 0.0
  %v304 = vadd.f32 %v302, %v303
  %v305 = vrot.slane %v304, 4
  %v306 = vadd.f32 %v304, %v305
  %v307 = vrot.slane %v306, 2
  %v308 = vadd.f32 %v306, %v307
  %v309 = vrot.slane %v308, 1
  %v310 = vadd.f32 %v308, %v309
  %vm311 = vcmask 516096
  %312 = vst.msk [vmem:[%s4] sm:$0x1] %vm311, %v310
  %v313 = vmul.f32 %v282, %v282
  %v314 = vmul.f32 %v283, %v283
  %v315 = vmul.f32 %v284, %v284
  %v316 = vmul.f32 %v285, %v285
  %v317 = vmul.f32 %v286, %v286
  %v318 = vmul.f32 %v287, %v287
  %v319 = vmul.f32 %v288, %v288
  %v320 = vmul.f32 %v289, %v289
  %v321 = vsel %vm62, %v313, 0.0
  %v322 = vsel %vm62, %v314, 0.0
  %v323 = vadd.f32 %v321, %v322
  %v324 = vsel %vm62, %v315, 0.0
  %v325 = vadd.f32 %v323, %v324
  %v326 = vsel %vm62, %v316, 0.0
  %v327 = vadd.f32 %v325, %v326
  %v328 = vsel %vm62, %v317, 0.0
  %v329 = vadd.f32 %v327, %v328
  %v330 = vsel %vm62, %v318, 0.0
  %v331 = vadd.f32 %v329, %v330
  %v332 = vsel %vm62, %v319, 0.0
  %v333 = vadd.f32 %v331, %v332
  %v334 = vsel %vm62, %v320, 0.0
  %v335 = vadd.f32 %v333, %v334
  %v336 = vrot.slane %v335, 4
  %v337 = vadd.f32 %v335, %v336
  %v338 = vrot.slane %v337, 2
  %v339 = vadd.f32 %v337, %v338
  %v340 = vrot.slane %v339, 1
  %v341 = vadd.f32 %v339, %v340
  %342 = vst.msk [vmem:[%s5] sm:$0x1] %vm311, %v341
  %v343 = vld [vmem:[%s2] sm:$0x1]
  %v345 = vperm.slane %v343, 0
  %v347 = vadd.f32 %v282, %v345
  %v348 = vadd.f32 %v283, %v345
  %v349 = vadd.f32 %v284, %v345
  %v350 = vadd.f32 %v285, %v345
  %v351 = vadd.f32 %v286, %v345
  %v352 = vadd.f32 %v287, %v345
  %v353 = vadd.f32 %v288, %v345
  %v354 = vadd.f32 %v289, %v345
  %355 = vst.msk [vmem:[%s3] sm:$0xff] %vm62, %v347
  %356 = vst.msk [vmem:[%s3 + $0x8] sm:$0xff] %vm62, %v348
  %357 = vst.msk [vmem:[%s3 + $0x10] sm:$0xff] %vm62, %v349
  %358 = vst.msk [vmem:[%s3 + $0x18] sm:$0xff] %vm62, %v350
  %359 = vst.msk [vmem:[%s3 + $0x20] sm:$0xff] %vm62, %v351
  %360 = vst.msk [vmem:[%s3 + $0x28] sm:$0xff] %vm62, %v352
  %361 = vst.msk [vmem:[%s3 + $0x30] sm:$0xff] %vm62, %v353
  %362 = vst.msk [vmem:[%s3 + $0x38] sm:$0xff] %vm62, %v354
  // Predicated region
  $region14: #{liaf_resblock_forward.4} parent=0 // pred_check
    _
  $region15: #{liaf_resblock_forward.4} parent=0 // pred_check_branch
    %364 = sbr.rel (0) target = $region17
  $region16: #{liaf_resblock_forward.4} parent=0 // pred_region
    _
  $region17: #{liaf_resblock_forward.4} parent=0 // pred_fallthru
    _
  // Predicated region
  $region18: #{liaf_resblock_forward.4} parent=0 // pred_check
    _
  $region19: #{liaf_resblock_forward.4} parent=0 // pred_check_branch
    %366 = sbr.rel (0) target = $region21
  $region20: #{liaf_resblock_forward.4} parent=0 // pred_region
    _
  $region21: #{liaf_resblock_forward.4} parent=0 // pred_fallthru
    _
  // Predicated region
  $region22: #{liaf_resblock_forward.4} parent=0 // pred_check
    _
  $region23: #{liaf_resblock_forward.4} parent=0 // pred_check_branch
    %368 = sbr.rel (0) target = $region25
  $region24: #{liaf_resblock_forward.4} parent=0 // pred_region
    _
  $region25: #{liaf_resblock_forward.4} parent=0 // pred_fallthru
    _
  // Predicated region
  $region26: #{liaf_resblock_forward.4} parent=0 // pred_check
    _
  $region27: #{liaf_resblock_forward.4} parent=0 // pred_check_branch
    %370 = sbr.rel (0) target = $region29
  $region28: #{liaf_resblock_forward.4} parent=0 // pred_region
    _
  $region29: #{liaf_resblock_forward.4} parent=0 // pred_fallthru
    _
  // Predicated region
  $region30: #{liaf_resblock_forward.4} parent=0 // pred_check
    _
  $region31: #{liaf_resblock_forward.4} parent=0 // pred_check_branch
    %372 = sbr.rel (0) target = $region33
  $region32: #{liaf_resblock_forward.4} parent=0 // pred_region
    _
  $region33: #{liaf_resblock_forward.4} parent=0 // pred_fallthru
    _
  // Predicated region
  $region34: #{liaf_resblock_forward.4} parent=0 // pred_check
    _
  $region35: #{liaf_resblock_forward.4} parent=0 // pred_check_branch
    %374 = sbr.rel (0) target = $region37
  $region36: #{liaf_resblock_forward.4} parent=0 // pred_region
    _
  $region37: #{liaf_resblock_forward.4} parent=0 // pred_fallthru
    _

</llo_original>
